<compile_context>
chip_gen: v5e
topology: v5e:2x2
jax: 0.10.0
libtpu: 0.0.40
codegen_flags: <defaults>
</compile_context>

<pallas_src>
import jax
import jax.numpy as jnp
from jax.experimental import pallas as pl
from jax.experimental.pallas import tpu as pltpu


def double_conv_down(x, w1, w2, scale1, shift1, scale2, shift2):
    """DoubleConvDown forward.

    x:      (N, Cin, D, H, W) f32, NCDHW (PyTorch layout)
    w1:     (Cout, Cin, 1, 3, 3)  conv1 weight (PyTorch OIDHW)
    w2:     (Cout, Cout, 3, 3, 3) conv2 weight
    scale*/shift*: (Cout,) folded BatchNorm(eval) affine per conv
    returns (N, Cout, D, H//2, W//2) f32, NCDHW.
    """
    N, Cin, D, H, W = x.shape
    Cout = w1.shape[0]
    assert H % 2 == 0 and W % 2 == 0, "even H/W assumed for the stride-2 downsample"
    Ho, Wo = H // 2, W // 2
    Hp2, Wp2 = Ho + 2, Wo + 2              # conv2 'same'-padded H/W extents
    HW2 = Hp2 * Wp2
    Sph = D * HW2                          # flattened polyphase-plane length
    Sp2 = (D + 2) * HW2                    # flattened conv2-input (padded) length
    U = (D - 1) * HW2 + (Ho - 1) * Wp2 + Wo  # flattened output extent (incl. phantoms)
    off0 = HW2 + Wp2 + 1                   # flat offset of (d,h,w)=(0,0,0) in the padded buf
    K1, K2 = 9 * Cin, 27 * Cout

    # ---------------- wrapper-side layout prep (pure XLA glue) -----------------
    # Polyphase split of the (0,1,1)-padded input: fuses the (1,2,2) stride into
    # data prep.  Each parity plane is zero-padded to (Hp2, Wp2) so its flattened
    # strides match the conv2 input buffer -> every conv1 tap is a contiguous
    # lane slice inside the kernel.
    xp = jnp.pad(x, ((0, 0), (0, 0), (0, 0), (1, 1), (1, 1)))
    planes = [xp[:, :, :, p::2, q::2] for p in (0, 1) for q in (0, 1)]
    ph = jnp.stack(planes, axis=1)                          # (N,4,Cin,D,Ho+1,Wo+1)
    ph = jnp.pad(ph, ((0, 0),) * 4 + ((0, 1), (0, 1)))      # -> (N,4,Cin,D,Hp2,Wp2)
    ph = ph.reshape(N, 4 * Cin, Sph).astype(jnp.bfloat16)   # contiguous reshape

    # Weights as im2col matrices (bf16 MXU operands).
    w1c = jnp.transpose(w1[:, :, 0], (0, 2, 3, 1)).reshape(Cout, K1).astype(jnp.bfloat16)
    w2c = jnp.transpose(w2, (0, 2, 3, 4, 1)).reshape(Cout, K2).astype(jnp.bfloat16)

    s1 = scale1.reshape(Cout, 1).astype(jnp.float32)
    t1 = shift1.reshape(Cout, 1).astype(jnp.float32)
    s2 = scale2.reshape(Cout, 1).astype(jnp.float32)
    t2 = shift2.reshape(Cout, 1).astype(jnp.float32)

    # Validity mask of the flattened output grid: u = d*HW2 + h*Wp2 + w is a real
    # output position iff h < Ho and w < Wo (phantom positions are masked to 0 so
    # they land harmlessly on the zero padding of the conv2 input buffer).
    uu = jnp.arange(U, dtype=jnp.int32)
    mask = (((uu // Wp2) % Hp2 < Ho) & (uu % Wp2 < Wo)).astype(jnp.float32)[None, :]

    # ------------------------------ fused kernel -------------------------------
    def kernel(ph_ref, w1_ref, w2_ref, s1_ref, t1_ref, s2_ref, t2_ref, mask_ref,
               o_ref, col1_ref, b_ref, col2_ref):
        # Zero the padded conv2-input buffer (zero padding + phantom positions).
        b_ref[...] = jnp.zeros(b_ref.shape, b_ref.dtype)

        # ---- conv1: im2col (K = 9*Cin) staged from the polyphase planes ----
        for ky in range(3):
            for kx in range(3):
                pq = (ky % 2) * 2 + (kx % 2)            # which parity plane
                sh = (ky // 2) * Wp2 + (kx // 2)        # flat shift inside the plane
                tap = ky * 3 + kx
                col1_ref[tap * Cin:(tap + 1) * Cin, :] = \
                    ph_ref[0, pq * Cin:(pq + 1) * Cin, sh:sh + U]
        acc1 = jnp.dot(w1_ref[...], col1_ref[...],
                       preferred_element_type=jnp.float32)          # (Cout, U) f32
        h1 = jnp.maximum(acc1 * s1_ref[...] + t1_ref[...], 0.0) * mask_ref[...]
        # Single contiguous store drops the BN+ReLU'd conv1 output into the
        # interior of the padded conv2 input buffer (intermediate stays in VMEM).
        b_ref[:, off0:off0 + U] = h1.astype(b_ref.dtype)

        # ---- conv2: im2col (K = 27*Cout) from the VMEM-resident padded buffer ----
        for kz in range(3):
            for ky in range(3):
                for kx in range(3):
                    tap = (kz * 3 + ky) * 3 + kx
                    sh = kz * HW2 + ky * Wp2 + kx
                    col2_ref[tap * Cout:(tap + 1) * Cout, :] = b_ref[:, sh:sh + U]
        acc2 = jnp.dot(w2_ref[...], col2_ref[...],
                       preferred_element_type=jnp.float32)          # (Cout, U) f32
        y = jnp.maximum(acc2 * s2_ref[...] + t2_ref[...], 0.0)
        o_ref[0] = y.astype(o_ref.dtype)

    out_flat = pl.pallas_call(
        kernel,
        out_shape=jax.ShapeDtypeStruct((N, Cout, U), jnp.float32),
        grid=(N,),
        in_specs=[
            pl.BlockSpec((1, 4 * Cin, Sph), lambda n: (n, 0, 0)),   # polyphase planes
            pl.BlockSpec((Cout, K1), lambda n: (0, 0)),             # conv1 weights
            pl.BlockSpec((Cout, K2), lambda n: (0, 0)),             # conv2 weights
            pl.BlockSpec((Cout, 1), lambda n: (0, 0)),              # BN1 scale
            pl.BlockSpec((Cout, 1), lambda n: (0, 0)),              # BN1 shift
            pl.BlockSpec((Cout, 1), lambda n: (0, 0)),              # BN2 scale
            pl.BlockSpec((Cout, 1), lambda n: (0, 0)),              # BN2 shift
            pl.BlockSpec((1, U), lambda n: (0, 0)),                 # validity mask
        ],
        out_specs=pl.BlockSpec((1, Cout, U), lambda n: (n, 0, 0)),
        scratch_shapes=[
            pltpu.VMEM((K1, U), jnp.bfloat16),       # conv1 im2col
            pltpu.VMEM((Cout, Sp2), jnp.bfloat16),   # padded intermediate (VMEM only)
            pltpu.VMEM((K2, U), jnp.bfloat16),       # conv2 im2col
        ],
        compiler_params=pltpu.CompilerParams(dimension_semantics=("parallel",)),
    )(ph, w1c, w2c, s1, t1, s2, t2, mask)

    # Drop the phantom columns; the output is 4x smaller than the input so this
    # reshape+slice glue is cheap.
    y = jnp.pad(out_flat, ((0, 0), (0, 0), (0, D * HW2 - U)))
    y = y.reshape(N, Cout, D, Hp2, Wp2)[:, :, :, :Ho, :Wo]
    return y


# ----------------------- pure-JAX reference (for checking) -----------------------
def reference(x, w1, g1, b1, m1, v1, w2, g2, b2, m2, v2, eps=1e-5):
    def conv(h, w, stride, pad):
        return jax.lax.conv_general_dilated(
            h, w, stride, pad,
            dimension_numbers=("NCDHW", "OIDHW", "NCDHW"),
            precision=jax.lax.Precision.HIGHEST)

    def bn_relu(h, g, b, m, v):
        sc = g / jnp.sqrt(v + eps)
        sh = b - m * sc
        h = h * sc[None, :, None, None, None] + sh[None, :, None, None, None]
        return jnp.maximum(h, 0.0)

    h = bn_relu(conv(x, w1, (1, 2, 2), [(0, 0), (1, 1), (1, 1)]), g1, b1, m1, v1)
    h = bn_relu(conv(h, w2, (1, 1, 1), [(1, 1), (1, 1), (1, 1)]), g2, b2, m2, v2)
    return h


if __name__ == "__main__":
    eps = 1e-5
    N, Cin, D, H, W = 2, 4, 4, 16, 16
    Cout = 8

    key = jax.random.PRNGKey(0)
    ks = jax.random.split(key, 11)
    x = jax.random.normal(ks[0], (N, Cin, D, H, W), jnp.float32)

    # Conv weights in PyTorch (OIDHW) layout.
    w1 = jax.random.normal(ks[1], (Cout, Cin, 1, 3, 3), jnp.float32) * 0.2
    w2 = jax.random.normal(ks[2], (Cout, Cout, 3, 3, 3), jnp.float32) * 0.1

    # BatchNorm3d (eval mode) parameters / running stats.
    g1 = 1.0 + 0.1 * jax.random.normal(ks[3], (Cout,), jnp.float32)
    b1 = 0.1 * jax.random.normal(ks[4], (Cout,), jnp.float32)
    m1 = 0.1 * jax.random.normal(ks[5], (Cout,), jnp.float32)
    v1 = 1.0 + 0.1 * jnp.abs(jax.random.normal(ks[6], (Cout,), jnp.float32))
    g2 = 1.0 + 0.1 * jax.random.normal(ks[7], (Cout,), jnp.float32)
    b2 = 0.1 * jax.random.normal(ks[8], (Cout,), jnp.float32)
    m2 = 0.1 * jax.random.normal(ks[9], (Cout,), jnp.float32)
    v2 = 1.0 + 0.1 * jnp.abs(jax.random.normal(ks[10], (Cout,), jnp.float32))

    # Fold BN (eval) into per-channel scale/shift.
    s1 = g1 / jnp.sqrt(v1 + eps)
    t1 = b1 - m1 * s1
    s2 = g2 / jnp.sqrt(v2 + eps)
    t2 = b2 - m2 * s2

    out = jax.block_until_ready(double_conv_down(x, w1, w2, s1, t1, s2, t2))
    ref = reference(x, w1, g1, b1, m1, v1, w2, g2, b2, m2, v2, eps=eps)

    assert out.shape == (N, Cout, D, H // 2, W // 2), out.shape
    err = jnp.abs(out - ref)
    # The kernel deliberately runs the MXU in bf16 (f32 accumulation), so the max
    # tolerance is bf16-appropriate; the mean-error check is the tight regression
    # catch (layout/indexing bugs produce O(1) errors everywhere, not 1e-2 noise).
    assert jnp.allclose(out, ref, atol=5e-2, rtol=5e-2), float(jnp.max(err))
    assert float(jnp.mean(err)) < 1.5e-2, float(jnp.mean(err))

    print("KERNEL_OK")
</pallas_src>

<mosaic_0001>
module attributes {stable_mosaic.version = 11 : i64} {
  func.func @kernel(%arg0: i32, %arg1: memref<1x16x400xbf16, #tpu.memory_space<vmem>>, %arg2: memref<8x36xbf16, #tpu.memory_space<vmem>>, %arg3: memref<8x216xbf16, #tpu.memory_space<vmem>>, %arg4: memref<8x1xf32, #tpu.memory_space<vmem>>, %arg5: memref<8x1xf32, #tpu.memory_space<vmem>>, %arg6: memref<8x1xf32, #tpu.memory_space<vmem>>, %arg7: memref<8x1xf32, #tpu.memory_space<vmem>>, %arg8: memref<1x378xf32, #tpu.memory_space<vmem>>, %arg9: memref<1x8x378xf32, #tpu.memory_space<vmem>>, %arg10: memref<36x378xbf16, #tpu.memory_space<vmem>>, %arg11: memref<8x600xbf16, #tpu.memory_space<vmem>>, %arg12: memref<216x378xbf16, #tpu.memory_space<vmem>>) attributes {dimension_semantics = [#tpu.dimension_semantics<parallel>], iteration_bounds = array<i64: 2>, scalar_prefetch = 0 : i64, scratch_operands = 3 : i64, tpu.core_type = #tpu.core_type<tc>, window_params = [{transform_indices = @transform_0, window_bounds = array<i64: 1, 16, 400>}, {pipeline_mode = #tpu.pipeline_mode<synchronous>, transform_indices = @transform_1, window_bounds = array<i64: 8, 36>}, {pipeline_mode = #tpu.pipeline_mode<synchronous>, transform_indices = @transform_2, window_bounds = array<i64: 8, 216>}, {pipeline_mode = #tpu.pipeline_mode<synchronous>, transform_indices = @transform_3, window_bounds = array<i64: 8, 1>}, {pipeline_mode = #tpu.pipeline_mode<synchronous>, transform_indices = @transform_4, window_bounds = array<i64: 8, 1>}, {pipeline_mode = #tpu.pipeline_mode<synchronous>, transform_indices = @transform_5, window_bounds = array<i64: 8, 1>}, {pipeline_mode = #tpu.pipeline_mode<synchronous>, transform_indices = @transform_6, window_bounds = array<i64: 8, 1>}, {pipeline_mode = #tpu.pipeline_mode<synchronous>, transform_indices = @transform_7, window_bounds = array<i64: 1, 378>}, {transform_indices = @transform_8, window_bounds = array<i64: 1, 8, 378>}]} {
    %cst = arith.constant 0.000000e+00 : bf16
    %0 = vector.broadcast %cst : bf16 to vector<8x600xbf16>
    %c0 = arith.constant 0 : index
    %c0_0 = arith.constant 0 : index
    %1 = vector.load %arg11[%c0, %c0_0] : memref<8x600xbf16, #tpu.memory_space<vmem>>, vector<8x600xbf16>
    tpu.vector_store %arg11[%c0, %c0_0], %0 {strides = array<i32>} : memref<8x600xbf16, #tpu.memory_space<vmem>>, vector<8x600xbf16>,
    %c0_1 = arith.constant 0 : index
    %c0_2 = arith.constant 0 : index
    %c0_3 = arith.constant 0 : index
    %2 = vector.load %arg1[%c0_1, %c0_2, %c0_3] : memref<1x16x400xbf16, #tpu.memory_space<vmem>>, vector<1x4x378xbf16>
    %3 = vector.shape_cast %2 : vector<1x4x378xbf16> to vector<4x378xbf16>
    %c0_4 = arith.constant 0 : index
    %c0_5 = arith.constant 0 : index
    %4 = vector.load %arg10[%c0_4, %c0_5] : memref<36x378xbf16, #tpu.memory_space<vmem>>, vector<4x378xbf16>
    tpu.vector_store %arg10[%c0_4, %c0_5], %3 {strides = array<i32>} : memref<36x378xbf16, #tpu.memory_space<vmem>>, vector<4x378xbf16>,
    %c0_6 = arith.constant 0 : index
    %c4 = arith.constant 4 : index
    %c0_7 = arith.constant 0 : index
    %5 = vector.load %arg1[%c0_6, %c4, %c0_7] : memref<1x16x400xbf16, #tpu.memory_space<vmem>>, vector<1x4x378xbf16>
    %6 = vector.shape_cast %5 : vector<1x4x378xbf16> to vector<4x378xbf16>
    %c4_8 = arith.constant 4 : index
    %c0_9 = arith.constant 0 : index
    %7 = vector.load %arg10[%c4_8, %c0_9] : memref<36x378xbf16, #tpu.memory_space<vmem>>, vector<4x378xbf16>
    tpu.vector_store %arg10[%c4_8, %c0_9], %6 {strides = array<i32>} : memref<36x378xbf16, #tpu.memory_space<vmem>>, vector<4x378xbf16>,
    %c0_10 = arith.constant 0 : index
    %c0_11 = arith.constant 0 : index
    %c1 = arith.constant 1 : index
    %8 = vector.load %arg1[%c0_10, %c0_11, %c1] : memref<1x16x400xbf16, #tpu.memory_space<vmem>>, vector<1x4x378xbf16>
    %9 = vector.shape_cast %8 : vector<1x4x378xbf16> to vector<4x378xbf16>
    %c8 = arith.constant 8 : index
    %c0_12 = arith.constant 0 : index
    %10 = vector.load %arg10[%c8, %c0_12] : memref<36x378xbf16, #tpu.memory_space<vmem>>, vector<4x378xbf16>
    tpu.vector_store %arg10[%c8, %c0_12], %9 {strides = array<i32>} : memref<36x378xbf16, #tpu.memory_space<vmem>>, vector<4x378xbf16>,
    %c0_13 = arith.constant 0 : index
    %c8_14 = arith.constant 8 : index
    %c0_15 = arith.constant 0 : index
    %11 = vector.load %arg1[%c0_13, %c8_14, %c0_15] : memref<1x16x400xbf16, #tpu.memory_space<vmem>>, vector<1x4x378xbf16>
    %12 = vector.shape_cast %11 : vector<1x4x378xbf16> to vector<4x378xbf16>
    %c12 = arith.constant 12 : index
    %c0_16 = arith.constant 0 : index
    %13 = vector.load %arg10[%c12, %c0_16] : memref<36x378xbf16, #tpu.memory_space<vmem>>, vector<4x378xbf16>
    tpu.vector_store %arg10[%c12, %c0_16], %12 {strides = array<i32>} : memref<36x378xbf16, #tpu.memory_space<vmem>>, vector<4x378xbf16>,
    %c0_17 = arith.constant 0 : index
    %c12_18 = arith.constant 12 : index
    %c0_19 = arith.constant 0 : index
    %14 = vector.load %arg1[%c0_17, %c12_18, %c0_19] : memref<1x16x400xbf16, #tpu.memory_space<vmem>>, vector<1x4x378xbf16>
    %15 = vector.shape_cast %14 : vector<1x4x378xbf16> to vector<4x378xbf16>
    %c16 = arith.constant 16 : index
    %c0_20 = arith.constant 0 : index
    %16 = vector.load %arg10[%c16, %c0_20] : memref<36x378xbf16, #tpu.memory_space<vmem>>, vector<4x378xbf16>
    tpu.vector_store %arg10[%c16, %c0_20], %15 {strides = array<i32>} : memref<36x378xbf16, #tpu.memory_space<vmem>>, vector<4x378xbf16>,
    %c0_21 = arith.constant 0 : index
    %c8_22 = arith.constant 8 : index
    %c1_23 = arith.constant 1 : index
    %17 = vector.load %arg1[%c0_21, %c8_22, %c1_23] : memref<1x16x400xbf16, #tpu.memory_space<vmem>>, vector<1x4x378xbf16>
    %18 = vector.shape_cast %17 : vector<1x4x378xbf16> to vector<4x378xbf16>
    %c20 = arith.constant 20 : index
    %c0_24 = arith.constant 0 : index
    %19 = vector.load %arg10[%c20, %c0_24] : memref<36x378xbf16, #tpu.memory_space<vmem>>, vector<4x378xbf16>
    tpu.vector_store %arg10[%c20, %c0_24], %18 {strides = array<i32>} : memref<36x378xbf16, #tpu.memory_space<vmem>>, vector<4x378xbf16>,
    %c0_25 = arith.constant 0 : index
    %c0_26 = arith.constant 0 : index
    %c10 = arith.constant 10 : index
    %20 = vector.load %arg1[%c0_25, %c0_26, %c10] : memref<1x16x400xbf16, #tpu.memory_space<vmem>>, vector<1x4x378xbf16>
    %21 = vector.shape_cast %20 : vector<1x4x378xbf16> to vector<4x378xbf16>
    %c24 = arith.constant 24 : index
    %c0_27 = arith.constant 0 : index
    %22 = vector.load %arg10[%c24, %c0_27] : memref<36x378xbf16, #tpu.memory_space<vmem>>, vector<4x378xbf16>
    tpu.vector_store %arg10[%c24, %c0_27], %21 {strides = array<i32>} : memref<36x378xbf16, #tpu.memory_space<vmem>>, vector<4x378xbf16>,
    %c0_28 = arith.constant 0 : index
    %c4_29 = arith.constant 4 : index
    %c10_30 = arith.constant 10 : index
    %23 = vector.load %arg1[%c0_28, %c4_29, %c10_30] : memref<1x16x400xbf16, #tpu.memory_space<vmem>>, vector<1x4x378xbf16>
    %24 = vector.shape_cast %23 : vector<1x4x378xbf16> to vector<4x378xbf16>
    %c28 = arith.constant 28 : index
    %c0_31 = arith.constant 0 : index
    %25 = vector.load %arg10[%c28, %c0_31] : memref<36x378xbf16, #tpu.memory_space<vmem>>, vector<4x378xbf16>
    tpu.vector_store %arg10[%c28, %c0_31], %24 {strides = array<i32>} : memref<36x378xbf16, #tpu.memory_space<vmem>>, vector<4x378xbf16>,
    %c0_32 = arith.constant 0 : index
    %c0_33 = arith.constant 0 : index
    %c11 = arith.constant 11 : index
    %26 = vector.load %arg1[%c0_32, %c0_33, %c11] : memref<1x16x400xbf16, #tpu.memory_space<vmem>>, vector<1x4x378xbf16>
    %27 = vector.shape_cast %26 : vector<1x4x378xbf16> to vector<4x378xbf16>
    %c32 = arith.constant 32 : index
    %c0_34 = arith.constant 0 : index
    %28 = vector.load %arg10[%c32, %c0_34] : memref<36x378xbf16, #tpu.memory_space<vmem>>, vector<4x378xbf16>
    tpu.vector_store %arg10[%c32, %c0_34], %27 {strides = array<i32>} : memref<36x378xbf16, #tpu.memory_space<vmem>>, vector<4x378xbf16>,
    %c0_35 = arith.constant 0 : index
    %c0_36 = arith.constant 0 : index
    %29 = vector.load %arg2[%c0_35, %c0_36] : memref<8x36xbf16, #tpu.memory_space<vmem>>, vector<8x36xbf16>
    %c0_37 = arith.constant 0 : index
    %c0_38 = arith.constant 0 : index
    %30 = vector.load %arg10[%c0_37, %c0_38] : memref<36x378xbf16, #tpu.memory_space<vmem>>, vector<36x378xbf16>
    %cst_39 = arith.constant dense<0.000000e+00> : vector<8x378xf32>
    %31 = tpu.matmul %29, %30, %cst_39 {dimension_numbers = #tpu.dot_dimension_numbers<[1], [0], [0], [1], [0, 0, 1, 1], [], []>} : vector<8x36xbf16>, vector<36x378xbf16>, vector<8x378xf32> -> vector<8x378xf32>
    %c0_40 = arith.constant 0 : index
    %c0_41 = arith.constant 0 : index
    %32 = vector.load %arg4[%c0_40, %c0_41] : memref<8x1xf32, #tpu.memory_space<vmem>>, vector<8x1xf32>
    %33 = vector.broadcast %32 : vector<8x1xf32> to vector<8x378xf32>
    %34 = arith.mulf %31, %33 : vector<8x378xf32>
    %c0_42 = arith.constant 0 : index
    %c0_43 = arith.constant 0 : index
    %35 = vector.load %arg5[%c0_42, %c0_43] : memref<8x1xf32, #tpu.memory_space<vmem>>, vector<8x1xf32>
    %36 = vector.broadcast %35 : vector<8x1xf32> to vector<8x378xf32>
    %37 = arith.addf %34, %36 : vector<8x378xf32>
    %cst_44 = arith.constant 0.000000e+00 : f32
    %38 = vector.broadcast %cst_44 : f32 to vector<8x378xf32>
    %39 = arith.maximumf %37, %38 : vector<8x378xf32>
    %c0_45 = arith.constant 0 : index
    %c0_46 = arith.constant 0 : index
    %40 = vector.load %arg8[%c0_45, %c0_46] : memref<1x378xf32, #tpu.memory_space<vmem>>, vector<1x378xf32>
    %41 = vector.broadcast %40 : vector<1x378xf32> to vector<8x378xf32>
    %42 = arith.mulf %39, %41 : vector<8x378xf32>
    %43 = arith.truncf %42 : vector<8x378xf32> to vector<8x378xbf16>
    %c0_47 = arith.constant 0 : index
    %c111 = arith.constant 111 : index
    %44 = vector.load %arg11[%c0_47, %c111] : memref<8x600xbf16, #tpu.memory_space<vmem>>, vector<8x378xbf16>
    tpu.vector_store %arg11[%c0_47, %c111], %43 {strides = array<i32>} : memref<8x600xbf16, #tpu.memory_space<vmem>>, vector<8x378xbf16>,
    %c0_48 = arith.constant 0 : index
    %c0_49 = arith.constant 0 : index
    %45 = vector.load %arg11[%c0_48, %c0_49] : memref<8x600xbf16, #tpu.memory_space<vmem>>, vector<8x378xbf16>
    %c0_50 = arith.constant 0 : index
    %c0_51 = arith.constant 0 : index
    %46 = vector.load %arg12[%c0_50, %c0_51] : memref<216x378xbf16, #tpu.memory_space<vmem>>, vector<8x378xbf16>
    tpu.vector_store %arg12[%c0_50, %c0_51], %45 {strides = array<i32>} : memref<216x378xbf16, #tpu.memory_space<vmem>>, vector<8x378xbf16>,
    %c0_52 = arith.constant 0 : index
    %c1_53 = arith.constant 1 : index
    %47 = vector.load %arg11[%c0_52, %c1_53] : memref<8x600xbf16, #tpu.memory_space<vmem>>, vector<8x378xbf16>
    %c8_54 = arith.constant 8 : index
    %c0_55 = arith.constant 0 : index
    %48 = vector.load %arg12[%c8_54, %c0_55] : memref<216x378xbf16, #tpu.memory_space<vmem>>, vector<8x378xbf16>
    tpu.vector_store %arg12[%c8_54, %c0_55], %47 {strides = array<i32>} : memref<216x378xbf16, #tpu.memory_space<vmem>>, vector<8x378xbf16>,
    %c0_56 = arith.constant 0 : index
    %c2 = arith.constant 2 : index
    %49 = vector.load %arg11[%c0_56, %c2] : memref<8x600xbf16, #tpu.memory_space<vmem>>, vector<8x378xbf16>
    %c16_57 = arith.constant 16 : index
    %c0_58 = arith.constant 0 : index
    %50 = vector.load %arg12[%c16_57, %c0_58] : memref<216x378xbf16, #tpu.memory_space<vmem>>, vector<8x378xbf16>
    tpu.vector_store %arg12[%c16_57, %c0_58], %49 {strides = array<i32>} : memref<216x378xbf16, #tpu.memory_space<vmem>>, vector<8x378xbf16>,
    %c0_59 = arith.constant 0 : index
    %c10_60 = arith.constant 10 : index
    %51 = vector.load %arg11[%c0_59, %c10_60] : memref<8x600xbf16, #tpu.memory_space<vmem>>, vector<8x378xbf16>
    %c24_61 = arith.constant 24 : index
    %c0_62 = arith.constant 0 : index
    %52 = vector.load %arg12[%c24_61, %c0_62] : memref<216x378xbf16, #tpu.memory_space<vmem>>, vector<8x378xbf16>
    tpu.vector_store %arg12[%c24_61, %c0_62], %51 {strides = array<i32>} : memref<216x378xbf16, #tpu.memory_space<vmem>>, vector<8x378xbf16>,
    %c0_63 = arith.constant 0 : index
    %c11_64 = arith.constant 11 : index
    %53 = vector.load %arg11[%c0_63, %c11_64] : memref<8x600xbf16, #tpu.memory_space<vmem>>, vector<8x378xbf16>
    %c32_65 = arith.constant 32 : index
    %c0_66 = arith.constant 0 : index
    %54 = vector.load %arg12[%c32_65, %c0_66] : memref<216x378xbf16, #tpu.memory_space<vmem>>, vector<8x378xbf16>
    tpu.vector_store %arg12[%c32_65, %c0_66], %53 {strides = array<i32>} : memref<216x378xbf16, #tpu.memory_space<vmem>>, vector<8x378xbf16>,
    %c0_67 = arith.constant 0 : index
    %c12_68 = arith.constant 12 : index
    %55 = vector.load %arg11[%c0_67, %c12_68] : memref<8x600xbf16, #tpu.memory_space<vmem>>, vector<8x378xbf16>
    %c40 = arith.constant 40 : index
    %c0_69 = arith.constant 0 : index
    %56 = vector.load %arg12[%c40, %c0_69] : memref<216x378xbf16, #tpu.memory_space<vmem>>, vector<8x378xbf16>
    tpu.vector_store %arg12[%c40, %c0_69], %55 {strides = array<i32>} : memref<216x378xbf16, #tpu.memory_space<vmem>>, vector<8x378xbf16>,
    %c0_70 = arith.constant 0 : index
    %c20_71 = arith.constant 20 : index
    %57 = vector.load %arg11[%c0_70, %c20_71] : memref<8x600xbf16, #tpu.memory_space<vmem>>, vector<8x378xbf16>
    %c48 = arith.constant 48 : index
    %c0_72 = arith.constant 0 : index
    %58 = vector.load %arg12[%c48, %c0_72] : memref<216x378xbf16, #tpu.memory_space<vmem>>, vector<8x378xbf16>
    tpu.vector_store %arg12[%c48, %c0_72], %57 {strides = array<i32>} : memref<216x378xbf16, #tpu.memory_space<vmem>>, vector<8x378xbf16>,
    %c0_73 = arith.constant 0 : index
    %c21 = arith.constant 21 : index
    %59 = vector.load %arg11[%c0_73, %c21] : memref<8x600xbf16, #tpu.memory_space<vmem>>, vector<8x378xbf16>
    %c56 = arith.constant 56 : index
    %c0_74 = arith.constant 0 : index
    %60 = vector.load %arg12[%c56, %c0_74] : memref<216x378xbf16, #tpu.memory_space<vmem>>, vector<8x378xbf16>
    tpu.vector_store %arg12[%c56, %c0_74], %59 {strides = array<i32>} : memref<216x378xbf16, #tpu.memory_space<vmem>>, vector<8x378xbf16>,
    %c0_75 = arith.constant 0 : index
    %c22 = arith.constant 22 : index
    %61 = vector.load %arg11[%c0_75, %c22] : memref<8x600xbf16, #tpu.memory_space<vmem>>, vector<8x378xbf16>
    %c64 = arith.constant 64 : index
    %c0_76 = arith.constant 0 : index
    %62 = vector.load %arg12[%c64, %c0_76] : memref<216x378xbf16, #tpu.memory_space<vmem>>, vector<8x378xbf16>
    tpu.vector_store %arg12[%c64, %c0_76], %61 {strides = array<i32>} : memref<216x378xbf16, #tpu.memory_space<vmem>>, vector<8x378xbf16>,
    %c0_77 = arith.constant 0 : index
    %c100 = arith.constant 100 : index
    %63 = vector.load %arg11[%c0_77, %c100] : memref<8x600xbf16, #tpu.memory_space<vmem>>, vector<8x378xbf16>
    %c72 = arith.constant 72 : index
    %c0_78 = arith.constant 0 : index
    %64 = vector.load %arg12[%c72, %c0_78] : memref<216x378xbf16, #tpu.memory_space<vmem>>, vector<8x378xbf16>
    tpu.vector_store %arg12[%c72, %c0_78], %63 {strides = array<i32>} : memref<216x378xbf16, #tpu.memory_space<vmem>>, vector<8x378xbf16>,
    %c0_79 = arith.constant 0 : index
    %c101 = arith.constant 101 : index
    %65 = vector.load %arg11[%c0_79, %c101] : memref<8x600xbf16, #tpu.memory_space<vmem>>, vector<8x378xbf16>
    %c80 = arith.constant 80 : index
    %c0_80 = arith.constant 0 : index
    %66 = vector.load %arg12[%c80, %c0_80] : memref<216x378xbf16, #tpu.memory_space<vmem>>, vector<8x378xbf16>
    tpu.vector_store %arg12[%c80, %c0_80], %65 {strides = array<i32>} : memref<216x378xbf16, #tpu.memory_space<vmem>>, vector<8x378xbf16>,
    %c0_81 = arith.constant 0 : index
    %c102 = arith.constant 102 : index
    %67 = vector.load %arg11[%c0_81, %c102] : memref<8x600xbf16, #tpu.memory_space<vmem>>, vector<8x378xbf16>
    %c88 = arith.constant 88 : index
    %c0_82 = arith.constant 0 : index
    %68 = vector.load %arg12[%c88, %c0_82] : memref<216x378xbf16, #tpu.memory_space<vmem>>, vector<8x378xbf16>
    tpu.vector_store %arg12[%c88, %c0_82], %67 {strides = array<i32>} : memref<216x378xbf16, #tpu.memory_space<vmem>>, vector<8x378xbf16>,
    %c0_83 = arith.constant 0 : index
    %c110 = arith.constant 110 : index
    %69 = vector.load %arg11[%c0_83, %c110] : memref<8x600xbf16, #tpu.memory_space<vmem>>, vector<8x378xbf16>
    %c96 = arith.constant 96 : index
    %c0_84 = arith.constant 0 : index
    %70 = vector.load %arg12[%c96, %c0_84] : memref<216x378xbf16, #tpu.memory_space<vmem>>, vector<8x378xbf16>
    tpu.vector_store %arg12[%c96, %c0_84], %69 {strides = array<i32>} : memref<216x378xbf16, #tpu.memory_space<vmem>>, vector<8x378xbf16>,
    %c0_85 = arith.constant 0 : index
    %c111_86 = arith.constant 111 : index
    %71 = vector.load %arg11[%c0_85, %c111_86] : memref<8x600xbf16, #tpu.memory_space<vmem>>, vector<8x378xbf16>
    %c104 = arith.constant 104 : index
    %c0_87 = arith.constant 0 : index
    %72 = vector.load %arg12[%c104, %c0_87] : memref<216x378xbf16, #tpu.memory_space<vmem>>, vector<8x378xbf16>
    tpu.vector_store %arg12[%c104, %c0_87], %71 {strides = array<i32>} : memref<216x378xbf16, #tpu.memory_space<vmem>>, vector<8x378xbf16>,
    %c0_88 = arith.constant 0 : index
    %c112 = arith.constant 112 : index
    %73 = vector.load %arg11[%c0_88, %c112] : memref<8x600xbf16, #tpu.memory_space<vmem>>, vector<8x378xbf16>
    %c112_89 = arith.constant 112 : index
    %c0_90 = arith.constant 0 : index
    %74 = vector.load %arg12[%c112_89, %c0_90] : memref<216x378xbf16, #tpu.memory_space<vmem>>, vector<8x378xbf16>
    tpu.vector_store %arg12[%c112_89, %c0_90], %73 {strides = array<i32>} : memref<216x378xbf16, #tpu.memory_space<vmem>>, vector<8x378xbf16>,
    %c0_91 = arith.constant 0 : index
    %c120 = arith.constant 120 : index
    %75 = vector.load %arg11[%c0_91, %c120] : memref<8x600xbf16, #tpu.memory_space<vmem>>, vector<8x378xbf16>
    %c120_92 = arith.constant 120 : index
    %c0_93 = arith.constant 0 : index
    %76 = vector.load %arg12[%c120_92, %c0_93] : memref<216x378xbf16, #tpu.memory_space<vmem>>, vector<8x378xbf16>
    tpu.vector_store %arg12[%c120_92, %c0_93], %75 {strides = array<i32>} : memref<216x378xbf16, #tpu.memory_space<vmem>>, vector<8x378xbf16>,
    %c0_94 = arith.constant 0 : index
    %c121 = arith.constant 121 : index
    %77 = vector.load %arg11[%c0_94, %c121] : memref<8x600xbf16, #tpu.memory_space<vmem>>, vector<8x378xbf16>
    %c128 = arith.constant 128 : index
    %c0_95 = arith.constant 0 : index
    %78 = vector.load %arg12[%c128, %c0_95] : memref<216x378xbf16, #tpu.memory_space<vmem>>, vector<8x378xbf16>
    tpu.vector_store %arg12[%c128, %c0_95], %77 {strides = array<i32>} : memref<216x378xbf16, #tpu.memory_space<vmem>>, vector<8x378xbf16>,
    %c0_96 = arith.constant 0 : index
    %c122 = arith.constant 122 : index
    %79 = vector.load %arg11[%c0_96, %c122] : memref<8x600xbf16, #tpu.memory_space<vmem>>, vector<8x378xbf16>
    %c136 = arith.constant 136 : index
    %c0_97 = arith.constant 0 : index
    %80 = vector.load %arg12[%c136, %c0_97] : memref<216x378xbf16, #tpu.memory_space<vmem>>, vector<8x378xbf16>
    tpu.vector_store %arg12[%c136, %c0_97], %79 {strides = array<i32>} : memref<216x378xbf16, #tpu.memory_space<vmem>>, vector<8x378xbf16>,
    %c0_98 = arith.constant 0 : index
    %c200 = arith.constant 200 : index
    %81 = vector.load %arg11[%c0_98, %c200] : memref<8x600xbf16, #tpu.memory_space<vmem>>, vector<8x378xbf16>
    %c144 = arith.constant 144 : index
    %c0_99 = arith.constant 0 : index
    %82 = vector.load %arg12[%c144, %c0_99] : memref<216x378xbf16, #tpu.memory_space<vmem>>, vector<8x378xbf16>
    tpu.vector_store %arg12[%c144, %c0_99], %81 {strides = array<i32>} : memref<216x378xbf16, #tpu.memory_space<vmem>>, vector<8x378xbf16>,
    %c0_100 = arith.constant 0 : index
    %c201 = arith.constant 201 : index
    %83 = vector.load %arg11[%c0_100, %c201] : memref<8x600xbf16, #tpu.memory_space<vmem>>, vector<8x378xbf16>
    %c152 = arith.constant 152 : index
    %c0_101 = arith.constant 0 : index
    %84 = vector.load %arg12[%c152, %c0_101] : memref<216x378xbf16, #tpu.memory_space<vmem>>, vector<8x378xbf16>
    tpu.vector_store %arg12[%c152, %c0_101], %83 {strides = array<i32>} : memref<216x378xbf16, #tpu.memory_space<vmem>>, vector<8x378xbf16>,
    %c0_102 = arith.constant 0 : index
    %c202 = arith.constant 202 : index
    %85 = vector.load %arg11[%c0_102, %c202] : memref<8x600xbf16, #tpu.memory_space<vmem>>, vector<8x378xbf16>
    %c160 = arith.constant 160 : index
    %c0_103 = arith.constant 0 : index
    %86 = vector.load %arg12[%c160, %c0_103] : memref<216x378xbf16, #tpu.memory_space<vmem>>, vector<8x378xbf16>
    tpu.vector_store %arg12[%c160, %c0_103], %85 {strides = array<i32>} : memref<216x378xbf16, #tpu.memory_space<vmem>>, vector<8x378xbf16>,
    %c0_104 = arith.constant 0 : index
    %c210 = arith.constant 210 : index
    %87 = vector.load %arg11[%c0_104, %c210] : memref<8x600xbf16, #tpu.memory_space<vmem>>, vector<8x378xbf16>
    %c168 = arith.constant 168 : index
    %c0_105 = arith.constant 0 : index
    %88 = vector.load %arg12[%c168, %c0_105] : memref<216x378xbf16, #tpu.memory_space<vmem>>, vector<8x378xbf16>
    tpu.vector_store %arg12[%c168, %c0_105], %87 {strides = array<i32>} : memref<216x378xbf16, #tpu.memory_space<vmem>>, vector<8x378xbf16>,
    %c0_106 = arith.constant 0 : index
    %c211 = arith.constant 211 : index
    %89 = vector.load %arg11[%c0_106, %c211] : memref<8x600xbf16, #tpu.memory_space<vmem>>, vector<8x378xbf16>
    %c176 = arith.constant 176 : index
    %c0_107 = arith.constant 0 : index
    %90 = vector.load %arg12[%c176, %c0_107] : memref<216x378xbf16, #tpu.memory_space<vmem>>, vector<8x378xbf16>
    tpu.vector_store %arg12[%c176, %c0_107], %89 {strides = array<i32>} : memref<216x378xbf16, #tpu.memory_space<vmem>>, vector<8x378xbf16>,
    %c0_108 = arith.constant 0 : index
    %c212 = arith.constant 212 : index
    %91 = vector.load %arg11[%c0_108, %c212] : memref<8x600xbf16, #tpu.memory_space<vmem>>, vector<8x378xbf16>
    %c184 = arith.constant 184 : index
    %c0_109 = arith.constant 0 : index
    %92 = vector.load %arg12[%c184, %c0_109] : memref<216x378xbf16, #tpu.memory_space<vmem>>, vector<8x378xbf16>
    tpu.vector_store %arg12[%c184, %c0_109], %91 {strides = array<i32>} : memref<216x378xbf16, #tpu.memory_space<vmem>>, vector<8x378xbf16>,
    %c0_110 = arith.constant 0 : index
    %c220 = arith.constant 220 : index
    %93 = vector.load %arg11[%c0_110, %c220] : memref<8x600xbf16, #tpu.memory_space<vmem>>, vector<8x378xbf16>
    %c192 = arith.constant 192 : index
    %c0_111 = arith.constant 0 : index
    %94 = vector.load %arg12[%c192, %c0_111] : memref<216x378xbf16, #tpu.memory_space<vmem>>, vector<8x378xbf16>
    tpu.vector_store %arg12[%c192, %c0_111], %93 {strides = array<i32>} : memref<216x378xbf16, #tpu.memory_space<vmem>>, vector<8x378xbf16>,
    %c0_112 = arith.constant 0 : index
    %c221 = arith.constant 221 : index
    %95 = vector.load %arg11[%c0_112, %c221] : memref<8x600xbf16, #tpu.memory_space<vmem>>, vector<8x378xbf16>
    %c200_113 = arith.constant 200 : index
    %c0_114 = arith.constant 0 : index
    %96 = vector.load %arg12[%c200_113, %c0_114] : memref<216x378xbf16, #tpu.memory_space<vmem>>, vector<8x378xbf16>
    tpu.vector_store %arg12[%c200_113, %c0_114], %95 {strides = array<i32>} : memref<216x378xbf16, #tpu.memory_space<vmem>>, vector<8x378xbf16>,
    %c0_115 = arith.constant 0 : index
    %c222 = arith.constant 222 : index
    %97 = vector.load %arg11[%c0_115, %c222] : memref<8x600xbf16, #tpu.memory_space<vmem>>, vector<8x378xbf16>
    %c208 = arith.constant 208 : index
    %c0_116 = arith.constant 0 : index
    %98 = vector.load %arg12[%c208, %c0_116] : memref<216x378xbf16, #tpu.memory_space<vmem>>, vector<8x378xbf16>
    tpu.vector_store %arg12[%c208, %c0_116], %97 {strides = array<i32>} : memref<216x378xbf16, #tpu.memory_space<vmem>>, vector<8x378xbf16>,
    %c0_117 = arith.constant 0 : index
    %c0_118 = arith.constant 0 : index
    %99 = vector.load %arg3[%c0_117, %c0_118] : memref<8x216xbf16, #tpu.memory_space<vmem>>, vector<8x216xbf16>
    %c0_119 = arith.constant 0 : index
    %c0_120 = arith.constant 0 : index
    %100 = vector.load %arg12[%c0_119, %c0_120] : memref<216x378xbf16, #tpu.memory_space<vmem>>, vector<216x378xbf16>
    %cst_121 = arith.constant dense<0.000000e+00> : vector<8x378xf32>
    %101 = tpu.matmul %99, %100, %cst_121 {dimension_numbers = #tpu.dot_dimension_numbers<[1], [0], [0], [1], [0, 0, 1, 1], [], []>} : vector<8x216xbf16>, vector<216x378xbf16>, vector<8x378xf32> -> vector<8x378xf32>
    %c0_122 = arith.constant 0 : index
    %c0_123 = arith.constant 0 : index
    %102 = vector.load %arg6[%c0_122, %c0_123] : memref<8x1xf32, #tpu.memory_space<vmem>>, vector<8x1xf32>
    %103 = vector.broadcast %102 : vector<8x1xf32> to vector<8x378xf32>
    %104 = arith.mulf %101, %103 : vector<8x378xf32>
    %c0_124 = arith.constant 0 : index
    %c0_125 = arith.constant 0 : index
    %105 = vector.load %arg7[%c0_124, %c0_125] : memref<8x1xf32, #tpu.memory_space<vmem>>, vector<8x1xf32>
    %106 = vector.broadcast %105 : vector<8x1xf32> to vector<8x378xf32>
    %107 = arith.addf %104, %106 : vector<8x378xf32>
    %cst_126 = arith.constant 0.000000e+00 : f32
    %108 = vector.broadcast %cst_126 : f32 to vector<8x378xf32>
    %109 = arith.maximumf %107, %108 : vector<8x378xf32>
    %c0_127 = arith.constant 0 : index
    %c0_128 = arith.constant 0 : index
    %c0_129 = arith.constant 0 : index
    %110 = vector.load %arg9[%c0_127, %c0_128, %c0_129] : memref<1x8x378xf32, #tpu.memory_space<vmem>>, vector<1x8x378xf32>
    %111 = vector.shape_cast %110 : vector<1x8x378xf32> to vector<8x378xf32>
    %112 = vector.shape_cast %109 : vector<8x378xf32> to vector<1x8x378xf32>
    tpu.vector_store %arg9[%c0_127, %c0_128, %c0_129], %112 {strides = array<i32>} : memref<1x8x378xf32, #tpu.memory_space<vmem>>, vector<1x8x378xf32>,
    return
  }
  func.func @transform_0(%arg0: i32) -> (i32, i32, i32) {
    %c0_i32 = arith.constant 0 : i32
    %c0_i32_0 = arith.constant 0 : i32
    %c0_i32_1 = arith.constant 0 : i32
    return %arg0, %c0_i32, %c0_i32_0 : i32, i32, i32
  }
  func.func @transform_1(%arg0: i32) -> (i32, i32) {
    %c0_i32 = arith.constant 0 : i32
    %c0_i32_0 = arith.constant 0 : i32
    %c0_i32_1 = arith.constant 0 : i32
    return %c0_i32, %c0_i32_0 : i32, i32
  }
  func.func @transform_2(%arg0: i32) -> (i32, i32) {
    %c0_i32 = arith.constant 0 : i32
    %c0_i32_0 = arith.constant 0 : i32
    %c0_i32_1 = arith.constant 0 : i32
    return %c0_i32, %c0_i32_0 : i32, i32
  }
  func.func @transform_3(%arg0: i32) -> (i32, i32) {
    %c0_i32 = arith.constant 0 : i32
    %c0_i32_0 = arith.constant 0 : i32
    %c0_i32_1 = arith.constant 0 : i32
    return %c0_i32, %c0_i32_0 : i32, i32
  }
  func.func @transform_4(%arg0: i32) -> (i32, i32) {
    %c0_i32 = arith.constant 0 : i32
    %c0_i32_0 = arith.constant 0 : i32
    %c0_i32_1 = arith.constant 0 : i32
    return %c0_i32, %c0_i32_0 : i32, i32
  }
  func.func @transform_5(%arg0: i32) -> (i32, i32) {
    %c0_i32 = arith.constant 0 : i32
    %c0_i32_0 = arith.constant 0 : i32
    %c0_i32_1 = arith.constant 0 : i32
    return %c0_i32, %c0_i32_0 : i32, i32
  }
  func.func @transform_6(%arg0: i32) -> (i32, i32) {
    %c0_i32 = arith.constant 0 : i32
    %c0_i32_0 = arith.constant 0 : i32
    %c0_i32_1 = arith.constant 0 : i32
    return %c0_i32, %c0_i32_0 : i32, i32
  }
  func.func @transform_7(%arg0: i32) -> (i32, i32) {
    %c0_i32 = arith.constant 0 : i32
    %c0_i32_0 = arith.constant 0 : i32
    %c0_i32_1 = arith.constant 0 : i32
    return %c0_i32, %c0_i32_0 : i32, i32
  }
  func.func @transform_8(%arg0: i32) -> (i32, i32, i32) {
    %c0_i32 = arith.constant 0 : i32
    %c0_i32_0 = arith.constant 0 : i32
    %c0_i32_1 = arith.constant 0 : i32
    return %arg0, %c0_i32, %c0_i32_0 : i32, i32, i32
  }
}

</mosaic_0001>

<llo_original>
// kernel: tpu_custom_call.1
$region0: #{tpu_custom_call.1}
  #allocation0 [shape = 'u32[]', space=smem, size = 0x4, offset = 0x4, fixed_abs, tag = 'smem constant byte address 0x4 - core index']
  #allocation1 [shape = 'u32[72,128]{1,0:T(1,128)}', space=vmem, size = 0x9000, scoped, tag = 'internal scratch']
  #allocation2 [shape = 'bf16[36,378]{1,0:T(8,128)(2,1)}', space=vmem, size = 0x7800, scoped, tag = 'scratch operand']
  #allocation3 [shape = 'bf16[8,600]{1,0:T(8,128)(2,1)}', space=vmem, size = 0x2800, scoped, tag = 'scratch operand']
  #allocation4 [shape = 'bf16[216,378]{1,0:T(8,128)(2,1)}', space=vmem, size = 0x28800, scoped, tag = 'scratch operand']
  %s0 = inlined_call_operand.hbm [shape: bf16[2,16,400], index: 0, kind: input, shape index: {}]
  %s1 = inlined_call_operand.vmem [shape: bf16[8,36], index: 1, kind: input, shape index: {}]
  %s2 = inlined_call_operand.vmem [shape: bf16[8,216], index: 2, kind: input, shape index: {}]
  %s3 = inlined_call_operand.vmem [shape: f32[8,1], index: 3, kind: input, shape index: {}]
  %s4 = inlined_call_operand.vmem [shape: f32[8,1], index: 4, kind: input, shape index: {}]
  %s5 = inlined_call_operand.vmem [shape: f32[8,1], index: 5, kind: input, shape index: {}]
  %s6 = inlined_call_operand.vmem [shape: f32[8,1], index: 6, kind: input, shape index: {}]
  %s7 = inlined_call_operand.vmem [shape: f32[1,378], index: 7, kind: input, shape index: {}]
  %s8 = inlined_call_operand.hbm [shape: f32[2,8,378], index: 8, kind: output, shape index: {}]
  %s9 = sld [smem:[#allocation0]]
  $region69: #{tpu_custom_call.1} parent=0
    _
  %s11 = ssub.s32 1, %s9
  %s12 = scalar_select 0, %s11, %s9
  $region1: #{tpu_custom_call.1} parent=0
    #allocation5 [shape = 'u8[32768]{0}', space=vmem, size = 0x8000, scoped, tag = 'input window, operand 0']
    #allocation6 [shape = 's32[2]{0}', space=sflag, size = 0x8, scoped, tag = 'scoped memory for tpu_custom_call.1']
    #allocation7 [shape = 's32[2]{0}', space=sflag, size = 0x8, scoped, tag = 'scoped memory for tpu_custom_call.1']
    #allocation8 [shape = 'u8[24576]{0}', space=vmem, size = 0x6000, scoped, tag = 'output window, operand 0']
    %13 = vsyncpa [#allocation6], 0
    %s14 = scalar_lea.sflag [#allocation6], 1
    %15 = vsyncpa %s14, 0
    %16 = vsyncpa [#allocation7], 0
    %s17 = scalar_lea.sflag [#allocation7], 1
    %18 = vsyncpa %s17, 0
    loop: start=0, step=1, limit=4
    $region2: #{tpu_custom_call.1} parent=1 // loop_pre_header
      _
    $region3: #{tpu_custom_call.1} parent=1 // loop_header
      %s20 = sphi 0, %s24
      %p21 = scmp.ge.s32.totalorder %s20, 4
      %s30 = sphi 0, %s32
      %s33 = sphi 0, %s30
      %s34 = sphi 0, %s33
      %s50 = sphi 0, %s34
      %s54 = sphi 0, %s54
      %s56 = sphi 0, %s54
      %s57 = sphi 0, %s56
      %s71 = sphi 0, %s57
      %s75 = sphi 0, %s75
      %s77 = sphi 0, %s75
      %s78 = sphi 0, %s77
      %s92 = sphi 0, %s78
      %s96 = sphi 0, %s96
      %s98 = sphi 0, %s96
      %s99 = sphi 0, %s98
      %s113 = sphi 0, %s99
      %s117 = sphi 0, %s117
      %s119 = sphi 0, %s117
      %s120 = sphi 0, %s119
      %s134 = sphi 0, %s120
      %s138 = sphi 0, %s138
      %s140 = sphi 0, %s138
      %s141 = sphi 0, %s140
      %s155 = sphi 0, %s141
      %s159 = sphi 0, %s159
      %s161 = sphi 0, %s159
      %s162 = sphi 0, %s161
      %s176 = sphi 0, %s162
      %s180 = sphi 0, %s180
      %s182 = sphi 0, %s180
      %s183 = sphi 0, %s182
      %s197 = sphi 0, %s183
      %s203 = sphi 0, %s205
      %s206 = sphi 0, %s203
      %s207 = sphi 0, %s206
      %s223 = sphi 0, %s207
    $region4: #{tpu_custom_call.1} parent=1 // loop_header_branch
      %23 = sbr.rel (%p21) target = $region8
    $region5: #{tpu_custom_call.1} parent=1 // loop_body
      %s25 = ssub.s32 %s20, 1
      %s26 = ssub.s32 %s20, 2
      %s27 = sadd.s32 %s20, 1
      %s28 = ssub.s32 %s20, %s27
      %p29 = scmp.eq.s32.totalorder %s28, 0
      %s31 = sadd.s32 %s30, 1
      %s32 = scalar_select %p29, %s30, %s31
      %p35 = pneg %p29
      %p36 = scmp.eq.s32.totalorder %s20, 1
      %p37 = por %p35, %p36
      %p38 = scmp.ne.s32.totalorder %s30, %s33
      %p39 = scmp.eq.s32.totalorder %s20, 0
      %p40 = por %p38, %p39
      %p41 = scmp.ne.s32.totalorder %s30, %s33
      %p42 = scmp.eq.s32.totalorder %s25, 1
      %p43 = por %p41, %p42
      %p44 = scmp.ne.s32.totalorder %s33, %s34
      %p45 = scmp.eq.s32.totalorder %s25, 0
      %p46 = por %p44, %p45
      %p47 = scmp.ne.s32.totalorder %s33, %s34
      %p48 = scmp.eq.s32.totalorder %s26, 1
      %p49 = por %p47, %p48
      %p51 = scmp.ne.s32.totalorder %s34, %s50
      %p52 = scmp.eq.s32.totalorder %s26, 0
      %p53 = por %p51, %p52
      %s55 = sadd.s32 %s54, 1
      %p58 = scmp.eq.s32.totalorder %s20, 1
      %p59 = scmp.ne.s32.totalorder %s54, %s56
      %p60 = scmp.eq.s32.totalorder %s20, 0
      %p61 = por %p59, %p60
      %p62 = scmp.ne.s32.totalorder %s54, %s56
      %p63 = scmp.eq.s32.totalorder %s25, 1
      %p64 = por %p62, %p63
      %p65 = scmp.ne.s32.totalorder %s56, %s57
      %p66 = scmp.eq.s32.totalorder %s25, 0
      %p67 = por %p65, %p66
      %p68 = scmp.ne.s32.totalorder %s56, %s57
      %p69 = scmp.eq.s32.totalorder %s26, 1
      %p70 = por %p68, %p69
      %p72 = scmp.ne.s32.totalorder %s57, %s71
      %p73 = scmp.eq.s32.totalorder %s26, 0
      %p74 = por %p72, %p73
      %s76 = sadd.s32 %s75, 1
      %p79 = scmp.eq.s32.totalorder %s20, 1
      %p80 = scmp.ne.s32.totalorder %s75, %s77
      %p81 = scmp.eq.s32.totalorder %s20, 0
      %p82 = por %p80, %p81
      %p83 = scmp.ne.s32.totalorder %s75, %s77
      %p84 = scmp.eq.s32.totalorder %s25, 1
      %p85 = por %p83, %p84
      %p86 = scmp.ne.s32.totalorder %s77, %s78
      %p87 = scmp.eq.s32.totalorder %s25, 0
      %p88 = por %p86, %p87
      %p89 = scmp.ne.s32.totalorder %s77, %s78
      %p90 = scmp.eq.s32.totalorder %s26, 1
      %p91 = por %p89, %p90
      %p93 = scmp.ne.s32.totalorder %s78, %s92
      %p94 = scmp.eq.s32.totalorder %s26, 0
      %p95 = por %p93, %p94
      %s97 = sadd.s32 %s96, 1
      %p100 = scmp.eq.s32.totalorder %s20, 1
      %p101 = scmp.ne.s32.totalorder %s96, %s98
      %p102 = scmp.eq.s32.totalorder %s20, 0
      %p103 = por %p101, %p102
      %p104 = scmp.ne.s32.totalorder %s96, %s98
      %p105 = scmp.eq.s32.totalorder %s25, 1
      %p106 = por %p104, %p105
      %p107 = scmp.ne.s32.totalorder %s98, %s99
      %p108 = scmp.eq.s32.totalorder %s25, 0
      %p109 = por %p107, %p108
      %p110 = scmp.ne.s32.totalorder %s98, %s99
      %p111 = scmp.eq.s32.totalorder %s26, 1
      %p112 = por %p110, %p111
      %p114 = scmp.ne.s32.totalorder %s99, %s113
      %p115 = scmp.eq.s32.totalorder %s26, 0
      %p116 = por %p114, %p115
      %s118 = sadd.s32 %s117, 1
      %p121 = scmp.eq.s32.totalorder %s20, 1
      %p122 = scmp.ne.s32.totalorder %s117, %s119
      %p123 = scmp.eq.s32.totalorder %s20, 0
      %p124 = por %p122, %p123
      %p125 = scmp.ne.s32.totalorder %s117, %s119
      %p126 = scmp.eq.s32.totalorder %s25, 1
      %p127 = por %p125, %p126
      %p128 = scmp.ne.s32.totalorder %s119, %s120
      %p129 = scmp.eq.s32.totalorder %s25, 0
      %p130 = por %p128, %p129
      %p131 = scmp.ne.s32.totalorder %s119, %s120
      %p132 = scmp.eq.s32.totalorder %s26, 1
      %p133 = por %p131, %p132
      %p135 = scmp.ne.s32.totalorder %s120, %s134
      %p136 = scmp.eq.s32.totalorder %s26, 0
      %p137 = por %p135, %p136
      %s139 = sadd.s32 %s138, 1
      %p142 = scmp.eq.s32.totalorder %s20, 1
      %p143 = scmp.ne.s32.totalorder %s138, %s140
      %p144 = scmp.eq.s32.totalorder %s20, 0
      %p145 = por %p143, %p144
      %p146 = scmp.ne.s32.totalorder %s138, %s140
      %p147 = scmp.eq.s32.totalorder %s25, 1
      %p148 = por %p146, %p147
      %p149 = scmp.ne.s32.totalorder %s140, %s141
      %p150 = scmp.eq.s32.totalorder %s25, 0
      %p151 = por %p149, %p150
      %p152 = scmp.ne.s32.totalorder %s140, %s141
      %p153 = scmp.eq.s32.totalorder %s26, 1
      %p154 = por %p152, %p153
      %p156 = scmp.ne.s32.totalorder %s141, %s155
      %p157 = scmp.eq.s32.totalorder %s26, 0
      %p158 = por %p156, %p157
      %s160 = sadd.s32 %s159, 1
      %p163 = scmp.eq.s32.totalorder %s20, 1
      %p164 = scmp.ne.s32.totalorder %s159, %s161
      %p165 = scmp.eq.s32.totalorder %s20, 0
      %p166 = por %p164, %p165
      %p167 = scmp.ne.s32.totalorder %s159, %s161
      %p168 = scmp.eq.s32.totalorder %s25, 1
      %p169 = por %p167, %p168
      %p170 = scmp.ne.s32.totalorder %s161, %s162
      %p171 = scmp.eq.s32.totalorder %s25, 0
      %p172 = por %p170, %p171
      %p173 = scmp.ne.s32.totalorder %s161, %s162
      %p174 = scmp.eq.s32.totalorder %s26, 1
      %p175 = por %p173, %p174
      %p177 = scmp.ne.s32.totalorder %s162, %s176
      %p178 = scmp.eq.s32.totalorder %s26, 0
      %p179 = por %p177, %p178
      %s181 = sadd.s32 %s180, 1
      %p184 = scmp.eq.s32.totalorder %s20, 1
      %p185 = scmp.ne.s32.totalorder %s180, %s182
      %p186 = scmp.eq.s32.totalorder %s20, 0
      %p187 = por %p185, %p186
      %p188 = scmp.ne.s32.totalorder %s180, %s182
      %p189 = scmp.eq.s32.totalorder %s25, 1
      %p190 = por %p188, %p189
      %p191 = scmp.ne.s32.totalorder %s182, %s183
      %p192 = scmp.eq.s32.totalorder %s25, 0
      %p193 = por %p191, %p192
      %p194 = scmp.ne.s32.totalorder %s182, %s183
      %p195 = scmp.eq.s32.totalorder %s26, 1
      %p196 = por %p194, %p195
      %p198 = scmp.ne.s32.totalorder %s183, %s197
      %p199 = scmp.eq.s32.totalorder %s26, 0
      %p200 = por %p198, %p199
      %s201 = ssub.s32 %s20, %s27
      %p202 = scmp.eq.s32.totalorder %s201, 0
      %s204 = sadd.s32 %s203, 1
      %s205 = scalar_select %p202, %s203, %s204
      %p208 = pneg %p202
      %p209 = scmp.eq.s32.totalorder %s20, 1
      %p210 = por %p208, %p209
      %p211 = scmp.ne.s32.totalorder %s203, %s206
      %p212 = scmp.eq.s32.totalorder %s20, 0
      %p213 = por %p211, %p212
      %p214 = scmp.ne.s32.totalorder %s203, %s206
      %p215 = scmp.eq.s32.totalorder %s25, 1
      %p216 = por %p214, %p215
      %p217 = scmp.ne.s32.totalorder %s206, %s207
      %p218 = scmp.eq.s32.totalorder %s25, 0
      %p219 = por %p217, %p218
      %p220 = scmp.ne.s32.totalorder %s206, %s207
      %p221 = scmp.eq.s32.totalorder %s26, 1
      %p222 = por %p220, %p221
      %p224 = scmp.ne.s32.totalorder %s207, %s223
      %p225 = scmp.eq.s32.totalorder %s26, 0
      %p226 = por %p224, %p225
      %p227 = scmp.le.s32.totalorder 1, %s20
      %p228 = scmp.lt.s32.totalorder %s20, 3
      %p229 = pnand %p227, %p228
      %p230 = pneg %p229
      // Predicated region
      $region9: #{tpu_custom_call.1} parent=5 // pred_check
        _
      $region10: #{tpu_custom_call.1} parent=5 // pred_check_branch
        %232 = sbr.rel (%p229) target = $region12
      $region11: #{tpu_custom_call.1} parent=5 // pred_region
        %s233 = ssub.s32 %s20, 1
        // Predicated region
        $region13: #{tpu_custom_call.1} parent=11 // pred_check
          %p234 = pneg %p67
        $region14: #{tpu_custom_call.1} parent=11 // pred_check_branch
          %236 = sbr.rel (%p234) target = $region16
        $region15: #{tpu_custom_call.1} parent=11 // pred_region
          _
        $region16: #{tpu_custom_call.1} parent=11 // pred_fallthru
          _
        // Predicated region
        $region17: #{tpu_custom_call.1} parent=11 // pred_check
          %p237 = pneg %p88
        $region18: #{tpu_custom_call.1} parent=11 // pred_check_branch
          %239 = sbr.rel (%p237) target = $region20
        $region19: #{tpu_custom_call.1} parent=11 // pred_region
          _
        $region20: #{tpu_custom_call.1} parent=11 // pred_fallthru
          _
        // Predicated region
        $region21: #{tpu_custom_call.1} parent=11 // pred_check
          %p240 = pneg %p109
        $region22: #{tpu_custom_call.1} parent=11 // pred_check_branch
          %242 = sbr.rel (%p240) target = $region24
        $region23: #{tpu_custom_call.1} parent=11 // pred_region
          _
        $region24: #{tpu_custom_call.1} parent=11 // pred_fallthru
          _
        // Predicated region
        $region25: #{tpu_custom_call.1} parent=11 // pred_check
          %p243 = pneg %p130
        $region26: #{tpu_custom_call.1} parent=11 // pred_check_branch
          %245 = sbr.rel (%p243) target = $region28
        $region27: #{tpu_custom_call.1} parent=11 // pred_region
          _
        $region28: #{tpu_custom_call.1} parent=11 // pred_fallthru
          _
        // Predicated region
        $region29: #{tpu_custom_call.1} parent=11 // pred_check
          %p246 = pneg %p151
        $region30: #{tpu_custom_call.1} parent=11 // pred_check_branch
          %248 = sbr.rel (%p246) target = $region32
        $region31: #{tpu_custom_call.1} parent=11 // pred_region
          _
        $region32: #{tpu_custom_call.1} parent=11 // pred_fallthru
          _
        // Predicated region
        $region33: #{tpu_custom_call.1} parent=11 // pred_check
          %p249 = pneg %p172
        $region34: #{tpu_custom_call.1} parent=11 // pred_check_branch
          %251 = sbr.rel (%p249) target = $region36
        $region35: #{tpu_custom_call.1} parent=11 // pred_region
          _
        $region36: #{tpu_custom_call.1} parent=11 // pred_fallthru
          _
        // Predicated region
        $region37: #{tpu_custom_call.1} parent=11 // pred_check
          %p252 = pneg %p193
        $region38: #{tpu_custom_call.1} parent=11 // pred_check_branch
          %254 = sbr.rel (%p252) target = $region40
        $region39: #{tpu_custom_call.1} parent=11 // pred_region
          _
        $region40: #{tpu_custom_call.1} parent=11 // pred_fallthru
          _
      $region12: #{tpu_custom_call.1} parent=5 // pred_fallthru
        _
      %p255 = scmp.lt.s32.totalorder %s20, 2
      // Predicated region
      $region41: #{tpu_custom_call.1} parent=5 // pred_check
        %p256 = pneg %p255
      $region42: #{tpu_custom_call.1} parent=5 // pred_check_branch
        %258 = sbr.rel (%p256) target = $region44
      $region43: #{tpu_custom_call.1} parent=5 // pred_region
        // Predicated region
        $region45: #{tpu_custom_call.1} parent=43 // pred_check
          %p259 = pneg %p40
        $region46: #{tpu_custom_call.1} parent=43 // pred_check_branch
          %261 = sbr.rel (%p259) target = $region48
        $region47: #{tpu_custom_call.1} parent=43 // pred_region
          %s262 = sand.u32 %s30, 1
          %s263 = scalar_lea.sflag [#allocation6], %s262
          %s264 = sand.u32 %s30, 1
          %s265 = smul.addr %s264, 32
          %s266 = scalar_lea.vmem [#allocation5], %s265
          %268 = vsyncadd %s263, 0
          %s269 = smul.addr %s20, 8
          %s270 = smul.addr %s269, 4
          %s271 = scalar_lea.hbm %s0, %s270
          %s272 = sshll.u32 %s271, 4
          %s273 = int_to_ptr.hbm [resolvable:$true] %s272
          %s274 = sshll.u32 %s266, 4
          %s275 = int_to_ptr.vmem [resolvable:$true] %s274
          %280 = dma.hbm_to_vmem [thread:$0]  %s273, 512, %s275, %s263, 256, 256, 16
        $region48: #{tpu_custom_call.1} parent=43 // pred_fallthru
          _
      $region44: #{tpu_custom_call.1} parent=5 // pred_fallthru
        _
      %p281 = scmp.le.s32.totalorder 1, %s20
      %p282 = scmp.lt.s32.totalorder %s20, 3
      %p283 = pnand %p281, %p282
      %p284 = pneg %p283
      // Predicated region
      $region49: #{tpu_custom_call.1} parent=5 // pred_check
        _
      $region50: #{tpu_custom_call.1} parent=5 // pred_check_branch
        %286 = sbr.rel (%p283) target = $region52
      $region51: #{tpu_custom_call.1} parent=5 // pred_region
        %s287 = ssub.s32 %s20, 1
        %s288 = sand.u32 %s33, 1
        %s289 = scalar_lea.sflag [#allocation6], %s288
        %s290 = sand.u32 %s33, 1
        %s291 = smul.addr %s290, 32
        %s292 = scalar_lea.vmem [#allocation5], %s291
        // Predicated region
        $region53: #{tpu_custom_call.1} parent=51 // pred_check
          %p293 = pneg %p46
        $region54: #{tpu_custom_call.1} parent=51 // pred_check_branch
          %295 = sbr.rel (%p293) target = $region56
        $region55: #{tpu_custom_call.1} parent=51 // pred_region
          %297 = dma.done %s289, 512
        $region56: #{tpu_custom_call.1} parent=51 // pred_fallthru
          _
        %s298 = sand.u32 %s33, 1
        %s299 = scalar_lea.sflag [#allocation6], %s298
        %s300 = sand.u32 %s33, 1
        %s301 = smul.addr %s300, 32
        %s302 = scalar_lea.vmem [#allocation5], %s301
        %p303 = pneg %p46
        %p304 = pneg %p43
        %p305 = pneg %p67
        %p306 = pneg %p64
        %p307 = pneg %p88
        %p308 = pneg %p85
        %p309 = pneg %p109
        %p310 = pneg %p106
        %p311 = pneg %p130
        %p312 = pneg %p127
        %p313 = pneg %p151
        %p314 = pneg %p148
        %p315 = pneg %p172
        %p316 = pneg %p169
        %p317 = pneg %p193
        %p318 = pneg %p190
        %p319 = pneg %p219
        %p320 = pneg %p216
        %s321 = sand.u32 %s206, 1
        %s322 = scalar_lea.sflag [#allocation7], %s321
        %s323 = sand.u32 %s206, 1
        %s324 = smul.addr %s323, 24
        %s325 = scalar_lea.vmem [#allocation8], %s324
        %327 = vst [vmem:[#allocation3] sm:$0xff] 0
        %328 = vst [vmem:[#allocation3 + $0x8] sm:$0xff] 0
        %vm329 = vcmask 715776
        %330 = vst.msk [vmem:[#allocation3 + $0x10] sm:$0xf] %vm329, 0
        %v331 = vld [vmem:[%s292] sm:$0x33]
        %v332 = vld [vmem:[%s292 + $0x8] sm:$0x3]
        %333 = vst [vmem:[#allocation2] sm:$0x33] %v331
        %vm334 = vcmask 992256
        %335 = vst.msk [vmem:[#allocation2 + $0x8] sm:$0x3] %vm334, %v332
        %v336 = vld [vmem:[%s292] sm:$0xcc]
        %v337 = vld [vmem:[%s292 + $0x8] sm:$0xc]
        %338 = vst [vmem:[#allocation2] sm:$0xcc] %v336
        %vm339 = vcmask 994306
        %340 = vst.msk [vmem:[#allocation2 + $0x8] sm:$0xc] %vm339, %v337
        %v341 = vld [vmem:[%s292] sm:$0x33]
        %v342 = vld [vmem:[%s292 + $0x8] sm:$0x3]
        %345 = vrot.lane.b32.xlu0 %v341, 127
        %v346 = vpop.permute.xlu0 %345
        %347 = vrot.lane.b32.xlu0 %v342, 127
        %v348 = vpop.permute.xlu0 %347
        %v349 = vrot.slane %v346, 4
        %v350 = vrot.slane %v348, 4
        %vm351 = vcmask 1043456
        %v352 = vsel %vm351, %v349, %v350
        %vm353 = vcmask 1039360
        %v354 = vsel %vm353, %v346, %v352
        %357 = vst [vmem:[#allocation2 + $0xc] sm:$0x33] %v354
        %358 = vst.msk [vmem:[#allocation2 + $0x14] sm:$0x3] %vm334, %v348
        %v359 = vld [vmem:[%s292 + $0x10] sm:$0x33]
        %v360 = vld [vmem:[%s292 + $0x18] sm:$0x3]
        %v363 = vrot.slane %v359, 6
        %v364 = vrot.slane %v360, 6
        %367 = vst [vmem:[#allocation2 + $0xc] sm:$0xcc] %v363
        %368 = vst.msk [vmem:[#allocation2 + $0x14] sm:$0xc] %vm339, %v364
        %v369 = vld [vmem:[%s292 + $0x10] sm:$0xcc]
        %v370 = vld [vmem:[%s292 + $0x18] sm:$0xc]
        %v373 = vrot.slane %v369, 6
        %v374 = vrot.slane %v373, 4
        %v375 = vrot.slane %v370, 6
        %v376 = vrot.slane %v375, 4
        %379 = vst [vmem:[#allocation2 + $0x18] sm:$0x33] %v374
        %380 = vst.msk [vmem:[#allocation2 + $0x20] sm:$0x3] %vm334, %v376
        %v381 = vld [vmem:[%s292 + $0x10] sm:$0x33]
        %v382 = vld [vmem:[%s292 + $0x18] sm:$0x3]
        %v385 = vrot.slane %v381, 6
        %v386 = vrot.slane %v382, 6
        %387 = vrot.lane.b32.xlu0 %v385, 127
        %v388 = vpop.permute.xlu0 %387
        %389 = vrot.lane.b32.xlu0 %v386, 127
        %v390 = vpop.permute.xlu0 %389
        %v391 = vrot.slane %v388, 4
        %v392 = vrot.slane %v390, 4
        %v393 = vsel %vm351, %v391, %v392
        %v394 = vsel %vm353, %v388, %v393
        %397 = vst [vmem:[#allocation2 + $0x18] sm:$0xcc] %v394
        %398 = vst.msk [vmem:[#allocation2 + $0x20] sm:$0xc] %vm339, %v390
        %v399 = vld [vmem:[%s292] sm:$0x33]
        %v400 = vld [vmem:[%s292 + $0x8] sm:$0x33]
        %403 = vrot.lane.b32.xlu0 %v399, 118
        %v404 = vpop.permute.xlu0 %403
        %405 = vrot.lane.b32.xlu0 %v400, 118
        %v406 = vpop.permute.xlu0 %405
        %v407 = vrot.slane %v404, 4
        %v408 = vrot.slane %v406, 4
        %v409 = vsel %vm351, %v407, %v408
        %vm410 = vcmask 965632
        %v411 = vsel %vm410, %v404, %v409
        %v412 = vsel %vm410, %v406, %v408
        %415 = vst [vmem:[#allocation2 + $0x24] sm:$0x33] %v411
        %416 = vst.msk [vmem:[#allocation2 + $0x2c] sm:$0x3] %vm334, %v412
        %v417 = vld [vmem:[%s292] sm:$0xcc]
        %v418 = vld [vmem:[%s292 + $0x8] sm:$0xcc]
        %421 = vrot.lane.b32.xlu0 %v417, 118
        %v422 = vpop.permute.xlu0 %421
        %423 = vrot.lane.b32.xlu0 %v418, 118
        %v424 = vpop.permute.xlu0 %423
        %v425 = vrot.slane %v422, 4
        %v426 = vrot.slane %v424, 4
        %v427 = vsel %vm351, %v425, %v426
        %v428 = vsel %vm410, %v422, %v427
        %v429 = vsel %vm410, %v424, %v426
        %432 = vst [vmem:[#allocation2 + $0x24] sm:$0xcc] %v428
        %433 = vst.msk [vmem:[#allocation2 + $0x2c] sm:$0xc] %vm339, %v429
        %v434 = vld [vmem:[%s292] sm:$0x33]
        %v435 = vld [vmem:[%s292 + $0x8] sm:$0x33]
        %438 = vrot.lane.b32.xlu0 %v434, 117
        %v439 = vpop.permute.xlu0 %438
        %440 = vrot.lane.b32.xlu0 %v435, 117
        %v441 = vpop.permute.xlu0 %440
        %v442 = vrot.slane %v439, 4
        %v443 = vrot.slane %v441, 4
        %v444 = vsel %vm351, %v442, %v443
        %vm445 = vcmask 957440
        %v446 = vsel %vm445, %v439, %v444
        %v447 = vsel %vm445, %v441, %v443
        %450 = vst [vmem:[#allocation2 + $0x30] sm:$0x33] %v446
        %451 = vst.msk [vmem:[#allocation2 + $0x38] sm:$0x3] %vm334, %v447
        %v452 = vld [vmem:[%s1] sm:$0xf]
        %v453 = vld [vmem:[#allocation2] sm:$0xff]
        %v454 = vld [vmem:[#allocation2 + $0x8] sm:$0xf]
        %v455 = vld [vmem:[#allocation2 + $0xc] sm:$0xff]
        %v456 = vld [vmem:[#allocation2 + $0x14] sm:$0xf]
        %v457 = vld [vmem:[#allocation2 + $0x18] sm:$0xff]
        %v458 = vld [vmem:[#allocation2 + $0x20] sm:$0xf]
        %v459 = vld [vmem:[#allocation2 + $0x24] sm:$0xff]
        %v460 = vld [vmem:[#allocation2 + $0x2c] sm:$0xf]
        %v461 = vld [vmem:[#allocation2 + $0x30] sm:$0x33]
        %v462 = vld [vmem:[#allocation2 + $0x38] sm:$0x3]
        %v473 = vunpack.c.l.b16 %v453
        %v474 = vunpack.c.h.b16 %v453
        %v475 = vunpack.c.l.b16 %v454
        %v476 = vunpack.c.l.b16 %v455
        %v477 = vunpack.c.h.b16 %v455
        %v478 = vunpack.c.l.b16 %v456
        %v479 = vunpack.c.l.b16 %v457
        %v480 = vunpack.c.h.b16 %v457
        %v481 = vunpack.c.l.b16 %v458
        %v482 = vunpack.c.l.b16 %v459
        %v483 = vunpack.c.h.b16 %v459
        %v484 = vunpack.c.l.b16 %v460
        %v485 = vunpack.c.l.b16 %v461
        %v486 = vunpack.c.h.b16 %v461
        %v487 = vunpack.c.l.b16 %v462
        %v488 = vpack.c.b16 %v476, %v473
        %v489 = vpack.c.b16 %v477, %v474
        %v490 = vpack.c.b16 %v478, %v475
        %v491 = vpack.c.b16 %v482, %v479
        %v492 = vpack.c.b16 %v483, %v480
        %v493 = vpack.c.b16 %v484, %v481
        %v494 = vpack.c.b16 %v485, %v485
        %v495 = vpack.c.b16 %v486, %v486
        %v496 = vpack.c.b16 %v487, %v487
        %vm503 = vcmask 293888
        %v505 = vsel %vm503, %v452, 0
        %vm507 = vcmask 1041408
        %v509 = vsel %vm507, %v494, 0
        %v512 = vsel %vm507, %v495, 0
        %v515 = vsel %vm507, %v496, 0
        %517 = vmatpush.bf16.msra.mxu0 0
        %518 = vmatpush.bf16.msra.mxu0 0
        %519 = vmatpush.bf16.msra.mxu0 0
        %520 = vmatpush.bf16.msra.mxu0 0
        %521 = vmatpush.bf16.msra.mxu0 0
        %522 = vmatpush.bf16.msra.mxu0 %v509
        %523 = vmatpush.bf16.msra.mxu0 %v491
        %524 = vmatpush.bf16.msra.mxu0 %v488
        %525 = vmatmul.bf16.gmra.mxu0 %v505
        %v526 = vpop.f32.mrf.mxu0
        %v527 = vadd.f32 0.0, %v526
        %v528 = vpop.f32.mrf.mxu0
        %529 = vdwg.mxu0
        %530 = vmatpush.bf16.msra.mxu0 0
        %531 = vmatpush.bf16.msra.mxu0 0
        %532 = vmatpush.bf16.msra.mxu0 0
        %533 = vmatpush.bf16.msra.mxu0 0
        %534 = vmatpush.bf16.msra.mxu0 0
        %535 = vmatpush.bf16.msra.mxu0 %v512
        %536 = vmatpush.bf16.msra.mxu0 %v492
        %537 = vmatpush.bf16.msra.mxu0 %v489
        %538 = vmatmul.bf16.gmra.mxu0 %v505
        %v539 = vpop.f32.mrf.mxu0
        %v540 = vadd.f32 0.0, %v539
        %v541 = vpop.f32.mrf.mxu0
        %542 = vdwg.mxu0
        %543 = vmatpush.bf16.msra.mxu0 0
        %544 = vmatpush.bf16.msra.mxu0 0
        %545 = vmatpush.bf16.msra.mxu0 0
        %546 = vmatpush.bf16.msra.mxu0 0
        %547 = vmatpush.bf16.msra.mxu0 0
        %548 = vmatpush.bf16.msra.mxu0 %v515
        %549 = vmatpush.bf16.msra.mxu0 %v493
        %550 = vmatpush.bf16.msra.mxu0 %v490
        %551 = vmatmul.bf16.gmra.mxu0 %v505
        %v552 = vpop.f32.mrf.mxu0
        %v553 = vadd.f32 0.0, %v552
        %v554 = vpop.f32.mrf.mxu0
        %555 = vdwg.mxu0
        %v556 = vld [vmem:[%s3] sm:$0xff]
        %558 = vset.pattern.permute.xlu0 0
        %559 = vperm.xlu0 %558, %v556
        %v560 = vpop.permute.xlu0 %559
        %v562 = vmul.f32 %v527, %v560
        %v563 = vmul.f32 %v540, %v560
        %v564 = vmul.f32 %v553, %v560
        %v565 = vld [vmem:[%s4] sm:$0xff]
        %567 = vset.pattern.permute.xlu0 0
        %568 = vperm.xlu0 %567, %v565
        %v569 = vpop.permute.xlu0 %568
        %v571 = vadd.f32 %v562, %v569
        %v572 = vadd.f32 %v563, %v569
        %v573 = vadd.f32 %v564, %v569
        %v574 = vmax.f32 %v571, 0.0
        %v575 = vmax.f32 %v572, 0.0
        %v576 = vmax.f32 %v573, 0.0
        %v577 = vld [vmem:[%s7] sm:$0x7]
        %v579 = vperm.slane %v577, 0
        %v580 = vperm.slane %v577, 1
        %v581 = vperm.slane %v577, 2
        %v585 = vmul.f32 %v574, %v579
        %v586 = vmul.f32 %v575, %v580
        %v587 = vmul.f32 %v576, %v581
        %v588 = vpack.c.bf16 %v586, %v585
        %v589 = vpack.c.bf16 %v587, %v587
        %592 = vrot.lane.b32.xlu0 %v588, 111
        %v593 = vpop.permute.xlu0 %592
        %594 = vrot.lane.b32.xlu0 %v589, 111
        %v595 = vpop.permute.xlu0 %594
        %v596 = vrot.slane %v593, 4
        %v597 = vrot.slane %v595, 4
        %vm598 = vcmask 908288
        %v599 = vsel %vm598, %v596, %v593
        %v600 = vsel %vm351, %v596, %v597
        %v601 = vsel %vm598, %v600, %v595
        %vm604 = vcmask 1044344
        %vm605 = vcmask 1047556
        %vm606 = vmor %vm605, %vm604
        %607 = vst.msk [vmem:[#allocation3] sm:$0xff] %vm606, %v599
        %vm608 = vcmask 1043456
        %vm609 = vcmask 859140
        %vm610 = vmor %vm609, %vm608
        %611 = vst.msk [vmem:[#allocation3 + $0x8] sm:$0xff] %vm610, %v601
        %v612 = vld [vmem:[#allocation3] sm:$0xff]
        %v613 = vld [vmem:[#allocation3 + $0x8] sm:$0xf]
        %614 = vst [vmem:[#allocation4] sm:$0xff] %v612
        %vm615 = vcmask 994304
        %616 = vst.msk [vmem:[#allocation4 + $0x8] sm:$0xf] %vm615, %v613
        %v617 = vld [vmem:[#allocation3] sm:$0xff]
        %v618 = vld [vmem:[#allocation3 + $0x8] sm:$0xf]
        %621 = vrot.lane.b32.xlu0 %v617, 127
        %v622 = vpop.permute.xlu0 %621
        %623 = vrot.lane.b32.xlu0 %v618, 127
        %v624 = vpop.permute.xlu0 %623
        %v625 = vrot.slane %v622, 4
        %v626 = vrot.slane %v624, 4
        %v627 = vsel %vm351, %v625, %v626
        %v628 = vsel %vm353, %v622, %v627
        %631 = vst [vmem:[#allocation4 + $0xc] sm:$0xff] %v628
        %632 = vst.msk [vmem:[#allocation4 + $0x14] sm:$0xf] %vm615, %v624
        %v633 = vld [vmem:[#allocation3] sm:$0xff]
        %v634 = vld [vmem:[#allocation3 + $0x8] sm:$0xf]
        %637 = vrot.lane.b32.xlu0 %v633, 126
        %v638 = vpop.permute.xlu0 %637
        %639 = vrot.lane.b32.xlu0 %v634, 126
        %v640 = vpop.permute.xlu0 %639
        %v641 = vrot.slane %v638, 4
        %v642 = vrot.slane %v640, 4
        %v643 = vsel %vm351, %v641, %v642
        %vm644 = vcmask 1031168
        %v645 = vsel %vm644, %v638, %v643
        %648 = vst [vmem:[#allocation4 + $0x18] sm:$0xff] %v645
        %649 = vst.msk [vmem:[#allocation4 + $0x20] sm:$0xf] %vm615, %v640
        %v650 = vld [vmem:[#allocation3] sm:$0xff]
        %v651 = vld [vmem:[#allocation3 + $0x8] sm:$0xff]
        %654 = vrot.lane.b32.xlu0 %v650, 118
        %v655 = vpop.permute.xlu0 %654
        %656 = vrot.lane.b32.xlu0 %v651, 118
        %v657 = vpop.permute.xlu0 %656
        %v658 = vrot.slane %v655, 4
        %v659 = vrot.slane %v657, 4
        %v660 = vsel %vm351, %v658, %v659
        %v661 = vsel %vm410, %v655, %v660
        %v662 = vsel %vm410, %v657, %v659
        %665 = vst [vmem:[#allocation4 + $0x24] sm:$0xff] %v661
        %666 = vst.msk [vmem:[#allocation4 + $0x2c] sm:$0xf] %vm615, %v662
        %v667 = vld [vmem:[#allocation3] sm:$0xff]
        %v668 = vld [vmem:[#allocation3 + $0x8] sm:$0xff]
        %671 = vrot.lane.b32.xlu0 %v667, 117
        %v672 = vpop.permute.xlu0 %671
        %673 = vrot.lane.b32.xlu0 %v668, 117
        %v674 = vpop.permute.xlu0 %673
        %v675 = vrot.slane %v672, 4
        %v676 = vrot.slane %v674, 4
        %v677 = vsel %vm351, %v675, %v676
        %v678 = vsel %vm445, %v672, %v677
        %v679 = vsel %vm445, %v674, %v676
        %682 = vst [vmem:[#allocation4 + $0x30] sm:$0xff] %v678
        %683 = vst.msk [vmem:[#allocation4 + $0x38] sm:$0xf] %vm615, %v679
        %v684 = vld [vmem:[#allocation3] sm:$0xff]
        %v685 = vld [vmem:[#allocation3 + $0x8] sm:$0xff]
        %688 = vrot.lane.b32.xlu0 %v684, 116
        %v689 = vpop.permute.xlu0 %688
        %690 = vrot.lane.b32.xlu0 %v685, 116
        %v691 = vpop.permute.xlu0 %690
        %v692 = vrot.slane %v689, 4
        %v693 = vrot.slane %v691, 4
        %v694 = vsel %vm351, %v692, %v693
        %vm695 = vcmask 949248
        %v696 = vsel %vm695, %v689, %v694
        %v697 = vsel %vm695, %v691, %v693
        %700 = vst [vmem:[#allocation4 + $0x3c] sm:$0xff] %v696
        %701 = vst.msk [vmem:[#allocation4 + $0x44] sm:$0xf] %vm615, %v697
        %v702 = vld [vmem:[#allocation3] sm:$0xff]
        %v703 = vld [vmem:[#allocation3 + $0x8] sm:$0xff]
        %706 = vrot.lane.b32.xlu0 %v702, 108
        %v707 = vpop.permute.xlu0 %706
        %708 = vrot.lane.b32.xlu0 %v703, 108
        %v709 = vpop.permute.xlu0 %708
        %v710 = vrot.slane %v707, 4
        %v711 = vrot.slane %v709, 4
        %v712 = vsel %vm351, %v710, %v711
        %vm713 = vcmask 883712
        %v714 = vsel %vm713, %v707, %v712
        %v715 = vsel %vm713, %v709, %v711
        %718 = vst [vmem:[#allocation4 + $0x48] sm:$0xff] %v714
        %719 = vst.msk [vmem:[#allocation4 + $0x50] sm:$0xf] %vm615, %v715
        %v720 = vld [vmem:[#allocation3] sm:$0xff]
        %v721 = vld [vmem:[#allocation3 + $0x8] sm:$0xff]
        %724 = vrot.lane.b32.xlu0 %v720, 107
        %v725 = vpop.permute.xlu0 %724
        %726 = vrot.lane.b32.xlu0 %v721, 107
        %v727 = vpop.permute.xlu0 %726
        %v728 = vrot.slane %v725, 4
        %v729 = vrot.slane %v727, 4
        %v730 = vsel %vm351, %v728, %v729
        %vm731 = vcmask 875520
        %v732 = vsel %vm731, %v725, %v730
        %v733 = vsel %vm731, %v727, %v729
        %736 = vst [vmem:[#allocation4 + $0x54] sm:$0xff] %v732
        %737 = vst.msk [vmem:[#allocation4 + $0x5c] sm:$0xf] %vm615, %v733
        %v738 = vld [vmem:[#allocation3] sm:$0xff]
        %v739 = vld [vmem:[#allocation3 + $0x8] sm:$0xff]
        %742 = vrot.lane.b32.xlu0 %v738, 106
        %v743 = vpop.permute.xlu0 %742
        %744 = vrot.lane.b32.xlu0 %v739, 106
        %v745 = vpop.permute.xlu0 %744
        %v746 = vrot.slane %v743, 4
        %v747 = vrot.slane %v745, 4
        %v748 = vsel %vm351, %v746, %v747
        %vm749 = vcmask 867328
        %v750 = vsel %vm749, %v743, %v748
        %v751 = vsel %vm749, %v745, %v747
        %754 = vst [vmem:[#allocation4 + $0x60] sm:$0xff] %v750
        %755 = vst.msk [vmem:[#allocation4 + $0x68] sm:$0xf] %vm615, %v751
        %v756 = vld [vmem:[#allocation3] sm:$0xff]
        %v757 = vld [vmem:[#allocation3 + $0x8] sm:$0xff]
        %760 = vrot.lane.b32.xlu0 %v756, 28
        %v761 = vpop.permute.xlu0 %760
        %762 = vrot.lane.b32.xlu0 %v757, 28
        %v763 = vpop.permute.xlu0 %762
        %v764 = vrot.slane %v761, 4
        %v765 = vrot.slane %v763, 4
        %v766 = vsel %vm351, %v764, %v765
        %vm767 = vcmask 228352
        %v768 = vsel %vm767, %v761, %v766
        %v769 = vsel %vm767, %v763, %v765
        %772 = vst [vmem:[#allocation4 + $0x6c] sm:$0xff] %v768
        %773 = vst.msk [vmem:[#allocation4 + $0x74] sm:$0xf] %vm615, %v769
        %v774 = vld [vmem:[#allocation3] sm:$0xff]
        %v775 = vld [vmem:[#allocation3 + $0x8] sm:$0xff]
        %778 = vrot.lane.b32.xlu0 %v774, 27
        %v779 = vpop.permute.xlu0 %778
        %780 = vrot.lane.b32.xlu0 %v775, 27
        %v781 = vpop.permute.xlu0 %780
        %v782 = vrot.slane %v779, 4
        %v783 = vrot.slane %v781, 4
        %v784 = vsel %vm351, %v782, %v783
        %vm785 = vcmask 220160
        %v786 = vsel %vm785, %v779, %v784
        %v787 = vsel %vm785, %v781, %v783
        %790 = vst [vmem:[#allocation4 + $0x78] sm:$0xff] %v786
        %791 = vst.msk [vmem:[#allocation4 + $0x80] sm:$0xf] %vm615, %v787
        %v792 = vld [vmem:[#allocation3] sm:$0xff]
        %v793 = vld [vmem:[#allocation3 + $0x8] sm:$0xff]
        %796 = vrot.lane.b32.xlu0 %v792, 26
        %v797 = vpop.permute.xlu0 %796
        %798 = vrot.lane.b32.xlu0 %v793, 26
        %v799 = vpop.permute.xlu0 %798
        %v800 = vrot.slane %v797, 4
        %v801 = vrot.slane %v799, 4
        %v802 = vsel %vm351, %v800, %v801
        %vm803 = vcmask 211968
        %v804 = vsel %vm803, %v797, %v802
        %v805 = vsel %vm803, %v799, %v801
        %808 = vst [vmem:[#allocation4 + $0x84] sm:$0xff] %v804
        %809 = vst.msk [vmem:[#allocation4 + $0x8c] sm:$0xf] %vm615, %v805
        %v810 = vld [vmem:[#allocation3] sm:$0xff]
        %v811 = vld [vmem:[#allocation3 + $0x8] sm:$0xff]
        %814 = vrot.lane.b32.xlu0 %v810, 18
        %v815 = vpop.permute.xlu0 %814
        %816 = vrot.lane.b32.xlu0 %v811, 18
        %v817 = vpop.permute.xlu0 %816
        %v818 = vrot.slane %v815, 4
        %v819 = vrot.slane %v817, 4
        %v820 = vsel %vm351, %v818, %v819
        %vm821 = vcmask 146432
        %v822 = vsel %vm821, %v815, %v820
        %v823 = vsel %vm821, %v817, %v819
        %826 = vst [vmem:[#allocation4 + $0x90] sm:$0xff] %v822
        %827 = vst.msk [vmem:[#allocation4 + $0x98] sm:$0xf] %vm615, %v823
        %v828 = vld [vmem:[#allocation3] sm:$0xff]
        %v829 = vld [vmem:[#allocation3 + $0x8] sm:$0xff]
        %832 = vrot.lane.b32.xlu0 %v828, 17
        %v833 = vpop.permute.xlu0 %832
        %834 = vrot.lane.b32.xlu0 %v829, 17
        %v835 = vpop.permute.xlu0 %834
        %v836 = vrot.slane %v833, 4
        %v837 = vrot.slane %v835, 4
        %v838 = vsel %vm351, %v836, %v837
        %vm839 = vcmask 138240
        %v840 = vsel %vm839, %v833, %v838
        %v841 = vsel %vm839, %v835, %v837
        %844 = vst [vmem:[#allocation4 + $0x9c] sm:$0xff] %v840
        %845 = vst.msk [vmem:[#allocation4 + $0xa4] sm:$0xf] %vm615, %v841
        %v846 = vld [vmem:[#allocation3] sm:$0xff]
        %v847 = vld [vmem:[#allocation3 + $0x8] sm:$0xff]
        %850 = vrot.lane.b32.xlu0 %v846, 16
        %v851 = vpop.permute.xlu0 %850
        %852 = vrot.lane.b32.xlu0 %v847, 16
        %v853 = vpop.permute.xlu0 %852
        %v854 = vrot.slane %v851, 4
        %v855 = vrot.slane %v853, 4
        %v856 = vsel %vm351, %v854, %v855
        %vm857 = vcmask 130048
        %v858 = vsel %vm857, %v851, %v856
        %v859 = vsel %vm857, %v853, %v855
        %862 = vst [vmem:[#allocation4 + $0xa8] sm:$0xff] %v858
        %863 = vst.msk [vmem:[#allocation4 + $0xb0] sm:$0xf] %vm615, %v859
        %v864 = vld [vmem:[#allocation3] sm:$0xff]
        %v865 = vld [vmem:[#allocation3 + $0x8] sm:$0xff]
        %868 = vrot.lane.b32.xlu0 %v864, 8
        %v869 = vpop.permute.xlu0 %868
        %870 = vrot.lane.b32.xlu0 %v865, 8
        %v871 = vpop.permute.xlu0 %870
        %v872 = vrot.slane %v869, 4
        %v873 = vrot.slane %v871, 4
        %v874 = vsel %vm351, %v872, %v873
        %vm875 = vcmask 64512
        %v876 = vsel %vm875, %v869, %v874
        %v877 = vsel %vm875, %v871, %v873
        %880 = vst [vmem:[#allocation4 + $0xb4] sm:$0xff] %v876
        %881 = vst.msk [vmem:[#allocation4 + $0xbc] sm:$0xf] %vm615, %v877
        %v882 = vld [vmem:[#allocation3] sm:$0xff]
        %v883 = vld [vmem:[#allocation3 + $0x8] sm:$0xff]
        %886 = vrot.lane.b32.xlu0 %v882, 7
        %v887 = vpop.permute.xlu0 %886
        %888 = vrot.lane.b32.xlu0 %v883, 7
        %v889 = vpop.permute.xlu0 %888
        %v890 = vrot.slane %v887, 4
        %v891 = vrot.slane %v889, 4
        %v892 = vsel %vm351, %v890, %v891
        %vm893 = vcmask 56320
        %v894 = vsel %vm893, %v887, %v892
        %v895 = vsel %vm893, %v889, %v891
        %898 = vst [vmem:[#allocation4 + $0xc0] sm:$0xff] %v894
        %899 = vst.msk [vmem:[#allocation4 + $0xc8] sm:$0xf] %vm615, %v895
        %v900 = vld [vmem:[#allocation3] sm:$0xff]
        %v901 = vld [vmem:[#allocation3 + $0x8] sm:$0xff]
        %904 = vrot.lane.b32.xlu0 %v900, 6
        %v905 = vpop.permute.xlu0 %904
        %906 = vrot.lane.b32.xlu0 %v901, 6
        %v907 = vpop.permute.xlu0 %906
        %v908 = vrot.slane %v905, 4
        %v909 = vrot.slane %v907, 4
        %v910 = vsel %vm351, %v908, %v909
        %vm911 = vcmask 48128
        %v912 = vsel %vm911, %v905, %v910
        %v913 = vsel %vm911, %v907, %v909
        %916 = vst [vmem:[#allocation4 + $0xcc] sm:$0xff] %v912
        %917 = vst.msk [vmem:[#allocation4 + $0xd4] sm:$0xf] %vm615, %v913
        %v918 = vld [vmem:[#allocation3 + $0x4] sm:$0xff]
        %v919 = vld [vmem:[#allocation3 + $0xc] sm:$0xff]
        %922 = vrot.lane.b32.xlu0 %v918, 56
        %v923 = vpop.permute.xlu0 %922
        %924 = vrot.lane.b32.xlu0 %v919, 56
        %v925 = vpop.permute.xlu0 %924
        %v926 = vrot.slane %v923, 4
        %v927 = vrot.slane %v925, 4
        %v928 = vsel %vm351, %v926, %v927
        %vm929 = vcmask 457728
        %v930 = vsel %vm929, %v923, %v928
        %v931 = vsel %vm929, %v925, %v927
        %934 = vst [vmem:[#allocation4 + $0xd8] sm:$0xff] %v930
        %935 = vst.msk [vmem:[#allocation4 + $0xe0] sm:$0xf] %vm615, %v931
        %v936 = vld [vmem:[#allocation3 + $0x4] sm:$0xff]
        %v937 = vld [vmem:[#allocation3 + $0xc] sm:$0xff]
        %940 = vrot.lane.b32.xlu0 %v936, 55
        %v941 = vpop.permute.xlu0 %940
        %942 = vrot.lane.b32.xlu0 %v937, 55
        %v943 = vpop.permute.xlu0 %942
        %v944 = vrot.slane %v941, 4
        %v945 = vrot.slane %v943, 4
        %v946 = vsel %vm351, %v944, %v945
        %vm947 = vcmask 449536
        %v948 = vsel %vm947, %v941, %v946
        %v949 = vsel %vm947, %v943, %v945
        %952 = vst [vmem:[#allocation4 + $0xe4] sm:$0xff] %v948
        %953 = vst.msk [vmem:[#allocation4 + $0xec] sm:$0xf] %vm615, %v949
        %v954 = vld [vmem:[#allocation3 + $0x4] sm:$0xff]
        %v955 = vld [vmem:[#allocation3 + $0xc] sm:$0xff]
        %958 = vrot.lane.b32.xlu0 %v954, 54
        %v959 = vpop.permute.xlu0 %958
        %960 = vrot.lane.b32.xlu0 %v955, 54
        %v961 = vpop.permute.xlu0 %960
        %v962 = vrot.slane %v959, 4
        %v963 = vrot.slane %v961, 4
        %v964 = vsel %vm351, %v962, %v963
        %vm965 = vcmask 441344
        %v966 = vsel %vm965, %v959, %v964
        %v967 = vsel %vm965, %v961, %v963
        %970 = vst [vmem:[#allocation4 + $0xf0] sm:$0xff] %v966
        %971 = vst.msk [vmem:[#allocation4 + $0xf8] sm:$0xf] %vm615, %v967
        %v972 = vld [vmem:[#allocation3 + $0x4] sm:$0xff]
        %v973 = vld [vmem:[#allocation3 + $0xc] sm:$0xff]
        %976 = vrot.lane.b32.xlu0 %v972, 46
        %v977 = vpop.permute.xlu0 %976
        %978 = vrot.lane.b32.xlu0 %v973, 46
        %v979 = vpop.permute.xlu0 %978
        %v980 = vrot.slane %v977, 4
        %v981 = vrot.slane %v979, 4
        %v982 = vsel %vm351, %v980, %v981
        %vm983 = vcmask 375808
        %v984 = vsel %vm983, %v977, %v982
        %v985 = vsel %vm983, %v979, %v981
        %988 = vst [vmem:[#allocation4 + $0xfc] sm:$0xff] %v984
        %989 = vst.msk [vmem:[#allocation4 + $0x104] sm:$0xf] %vm615, %v985
        %v990 = vld [vmem:[#allocation3 + $0x4] sm:$0xff]
        %v991 = vld [vmem:[#allocation3 + $0xc] sm:$0xff]
        %994 = vrot.lane.b32.xlu0 %v990, 45
        %v995 = vpop.permute.xlu0 %994
        %996 = vrot.lane.b32.xlu0 %v991, 45
        %v997 = vpop.permute.xlu0 %996
        %v998 = vrot.slane %v995, 4
        %v999 = vrot.slane %v997, 4
        %v1000 = vsel %vm351, %v998, %v999
        %vm1001 = vcmask 367616
        %v1002 = vsel %vm1001, %v995, %v1000
        %v1003 = vsel %vm1001, %v997, %v999
        %1006 = vst [vmem:[#allocation4 + $0x108] sm:$0xff] %v1002
        %1007 = vst.msk [vmem:[#allocation4 + $0x110] sm:$0xf] %vm615, %v1003
        %v1008 = vld [vmem:[#allocation3 + $0x4] sm:$0xff]
        %v1009 = vld [vmem:[#allocation3 + $0xc] sm:$0xff]
        %1012 = vrot.lane.b32.xlu0 %v1008, 44
        %v1013 = vpop.permute.xlu0 %1012
        %1014 = vrot.lane.b32.xlu0 %v1009, 44
        %v1015 = vpop.permute.xlu0 %1014
        %v1016 = vrot.slane %v1013, 4
        %v1017 = vrot.slane %v1015, 4
        %v1018 = vsel %vm351, %v1016, %v1017
        %vm1019 = vcmask 359424
        %v1020 = vsel %vm1019, %v1013, %v1018
        %v1021 = vsel %vm1019, %v1015, %v1017
        %1024 = vst [vmem:[#allocation4 + $0x114] sm:$0xff] %v1020
        %1025 = vst.msk [vmem:[#allocation4 + $0x11c] sm:$0xf] %vm615, %v1021
        %v1026 = vld [vmem:[#allocation3 + $0x4] sm:$0xff]
        %v1027 = vld [vmem:[#allocation3 + $0xc] sm:$0xff]
        %1030 = vrot.lane.b32.xlu0 %v1026, 36
        %v1031 = vpop.permute.xlu0 %1030
        %1032 = vrot.lane.b32.xlu0 %v1027, 36
        %v1033 = vpop.permute.xlu0 %1032
        %v1034 = vrot.slane %v1031, 4
        %v1035 = vrot.slane %v1033, 4
        %v1036 = vsel %vm351, %v1034, %v1035
        %vm1037 = vcmask 293888
        %v1038 = vsel %vm1037, %v1031, %v1036
        %v1039 = vsel %vm1037, %v1033, %v1035
        %1042 = vst [vmem:[#allocation4 + $0x120] sm:$0xff] %v1038
        %1043 = vst.msk [vmem:[#allocation4 + $0x128] sm:$0xf] %vm615, %v1039
        %v1044 = vld [vmem:[#allocation3 + $0x4] sm:$0xff]
        %v1045 = vld [vmem:[#allocation3 + $0xc] sm:$0xff]
        %1048 = vrot.lane.b32.xlu0 %v1044, 35
        %v1049 = vpop.permute.xlu0 %1048
        %1050 = vrot.lane.b32.xlu0 %v1045, 35
        %v1051 = vpop.permute.xlu0 %1050
        %v1052 = vrot.slane %v1049, 4
        %v1053 = vrot.slane %v1051, 4
        %v1054 = vsel %vm351, %v1052, %v1053
        %vm1055 = vcmask 285696
        %v1056 = vsel %vm1055, %v1049, %v1054
        %v1057 = vsel %vm1055, %v1051, %v1053
        %1060 = vst [vmem:[#allocation4 + $0x12c] sm:$0xff] %v1056
        %1061 = vst.msk [vmem:[#allocation4 + $0x134] sm:$0xf] %vm615, %v1057
        %v1062 = vld [vmem:[#allocation3 + $0x4] sm:$0xff]
        %v1063 = vld [vmem:[#allocation3 + $0xc] sm:$0xff]
        %1066 = vrot.lane.b32.xlu0 %v1062, 34
        %v1067 = vpop.permute.xlu0 %1066
        %1068 = vrot.lane.b32.xlu0 %v1063, 34
        %v1069 = vpop.permute.xlu0 %1068
        %v1070 = vrot.slane %v1067, 4
        %v1071 = vrot.slane %v1069, 4
        %v1072 = vsel %vm351, %v1070, %v1071
        %vm1073 = vcmask 277504
        %v1074 = vsel %vm1073, %v1067, %v1072
        %v1075 = vsel %vm1073, %v1069, %v1071
        %1078 = vst [vmem:[#allocation4 + $0x138] sm:$0xff] %v1074
        %1079 = vst.msk [vmem:[#allocation4 + $0x140] sm:$0xf] %vm615, %v1075
        %v1080 = vld [vmem:[%s2] sm:$0xff]
        %v1081 = vld [vmem:[#allocation4] sm:$0xff]
        %v1082 = vld [vmem:[#allocation4 + $0x8] sm:$0xf]
        %v1083 = vld [vmem:[#allocation4 + $0xc] sm:$0xff]
        %v1084 = vld [vmem:[#allocation4 + $0x14] sm:$0xf]
        %v1085 = vld [vmem:[#allocation4 + $0x18] sm:$0xff]
        %v1086 = vld [vmem:[#allocation4 + $0x20] sm:$0xf]
        %v1087 = vld [vmem:[#allocation4 + $0x24] sm:$0xff]
        %v1088 = vld [vmem:[#allocation4 + $0x2c] sm:$0xf]
        %v1089 = vld [vmem:[#allocation4 + $0x30] sm:$0xff]
        %v1090 = vld [vmem:[#allocation4 + $0x38] sm:$0xf]
        %v1091 = vld [vmem:[#allocation4 + $0x3c] sm:$0xff]
        %v1092 = vld [vmem:[#allocation4 + $0x44] sm:$0xf]
        %v1093 = vld [vmem:[#allocation4 + $0x48] sm:$0xff]
        %v1094 = vld [vmem:[#allocation4 + $0x50] sm:$0xf]
        %v1095 = vld [vmem:[#allocation4 + $0x54] sm:$0xff]
        %v1096 = vld [vmem:[#allocation4 + $0x5c] sm:$0xf]
        %v1097 = vld [vmem:[#allocation4 + $0x60] sm:$0xff]
        %v1098 = vld [vmem:[#allocation4 + $0x68] sm:$0xf]
        %v1099 = vld [vmem:[#allocation4 + $0x6c] sm:$0xff]
        %v1100 = vld [vmem:[#allocation4 + $0x74] sm:$0xf]
        %v1101 = vld [vmem:[#allocation4 + $0x78] sm:$0xff]
        %v1102 = vld [vmem:[#allocation4 + $0x80] sm:$0xf]
        %v1103 = vld [vmem:[#allocation4 + $0x84] sm:$0xff]
        %v1104 = vld [vmem:[#allocation4 + $0x8c] sm:$0xf]
        %v1105 = vld [vmem:[#allocation4 + $0x90] sm:$0xff]
        %v1106 = vld [vmem:[#allocation4 + $0x98] sm:$0xf]
        %v1107 = vld [vmem:[#allocation4 + $0x9c] sm:$0xff]
        %v1108 = vld [vmem:[#allocation4 + $0xa4] sm:$0xf]
        %v1109 = vld [vmem:[#allocation4 + $0xa8] sm:$0xff]
        %v1110 = vld [vmem:[#allocation4 + $0xb0] sm:$0xf]
        %v1111 = vld [vmem:[#allocation4 + $0xb4] sm:$0xff]
        %v1112 = vld [vmem:[#allocation4 + $0xbc] sm:$0xf]
        %v1113 = vld [vmem:[#allocation4 + $0xc0] sm:$0xff]
        %v1114 = vld [vmem:[#allocation4 + $0xc8] sm:$0xf]
        %v1115 = vld [vmem:[#allocation4 + $0xcc] sm:$0xff]
        %v1116 = vld [vmem:[#allocation4 + $0xd4] sm:$0xf]
        %v1117 = vld [vmem:[#allocation4 + $0xd8] sm:$0xff]
        %v1118 = vld [vmem:[#allocation4 + $0xe0] sm:$0xf]
        %v1119 = vld [vmem:[#allocation4 + $0xe4] sm:$0xff]
        %v1120 = vld [vmem:[#allocation4 + $0xec] sm:$0xf]
        %v1121 = vld [vmem:[#allocation4 + $0xf0] sm:$0xff]
        %v1122 = vld [vmem:[#allocation4 + $0xf8] sm:$0xf]
        %v1123 = vld [vmem:[#allocation4 + $0xfc] sm:$0xff]
        %v1124 = vld [vmem:[#allocation4 + $0x104] sm:$0xf]
        %v1125 = vld [vmem:[#allocation4 + $0x108] sm:$0xff]
        %v1126 = vld [vmem:[#allocation4 + $0x110] sm:$0xf]
        %v1127 = vld [vmem:[#allocation4 + $0x114] sm:$0xff]
        %v1128 = vld [vmem:[#allocation4 + $0x11c] sm:$0xf]
        %v1129 = vld [vmem:[#allocation4 + $0x120] sm:$0xff]
        %v1130 = vld [vmem:[#allocation4 + $0x128] sm:$0xf]
        %v1131 = vld [vmem:[#allocation4 + $0x12c] sm:$0xff]
        %v1132 = vld [vmem:[#allocation4 + $0x134] sm:$0xf]
        %v1133 = vld [vmem:[#allocation4 + $0x138] sm:$0xff]
        %v1134 = vld [vmem:[#allocation4 + $0x140] sm:$0xf]
        %v1136 = vunpack.c.l.b16 %v1080
        %v1137 = vunpack.c.h.b16 %v1080
        %v1138 = vpack.c.b16 %v1136, %v1136
        %v1139 = vpack.c.b16 %v1137, %v1137
        %v1195 = vunpack.c.l.b16 %v1081
        %v1196 = vunpack.c.h.b16 %v1081
        %v1197 = vunpack.c.l.b16 %v1082
        %v1198 = vunpack.c.l.b16 %v1083
        %v1199 = vunpack.c.h.b16 %v1083
        %v1200 = vunpack.c.l.b16 %v1084
        %v1201 = vunpack.c.l.b16 %v1085
        %v1202 = vunpack.c.h.b16 %v1085
        %v1203 = vunpack.c.l.b16 %v1086
        %v1204 = vunpack.c.l.b16 %v1087
        %v1205 = vunpack.c.h.b16 %v1087
        %v1206 = vunpack.c.l.b16 %v1088
        %v1207 = vunpack.c.l.b16 %v1089
        %v1208 = vunpack.c.h.b16 %v1089
        %v1209 = vunpack.c.l.b16 %v1090
        %v1210 = vunpack.c.l.b16 %v1091
        %v1211 = vunpack.c.h.b16 %v1091
        %v1212 = vunpack.c.l.b16 %v1092
        %v1213 = vunpack.c.l.b16 %v1093
        %v1214 = vunpack.c.h.b16 %v1093
        %v1215 = vunpack.c.l.b16 %v1094
        %v1216 = vunpack.c.l.b16 %v1095
        %v1217 = vunpack.c.h.b16 %v1095
        %v1218 = vunpack.c.l.b16 %v1096
        %v1219 = vunpack.c.l.b16 %v1097
        %v1220 = vunpack.c.h.b16 %v1097
        %v1221 = vunpack.c.l.b16 %v1098
        %v1222 = vunpack.c.l.b16 %v1099
        %v1223 = vunpack.c.h.b16 %v1099
        %v1224 = vunpack.c.l.b16 %v1100
        %v1225 = vunpack.c.l.b16 %v1101
        %v1226 = vunpack.c.h.b16 %v1101
        %v1227 = vunpack.c.l.b16 %v1102
        %v1228 = vunpack.c.l.b16 %v1103
        %v1229 = vunpack.c.h.b16 %v1103
        %v1230 = vunpack.c.l.b16 %v1104
        %v1231 = vunpack.c.l.b16 %v1105
        %v1232 = vunpack.c.h.b16 %v1105
        %v1233 = vunpack.c.l.b16 %v1106
        %v1234 = vunpack.c.l.b16 %v1107
        %v1235 = vunpack.c.h.b16 %v1107
        %v1236 = vunpack.c.l.b16 %v1108
        %v1237 = vunpack.c.l.b16 %v1109
        %v1238 = vunpack.c.h.b16 %v1109
        %v1239 = vunpack.c.l.b16 %v1110
        %v1240 = vunpack.c.l.b16 %v1111
        %v1241 = vunpack.c.h.b16 %v1111
        %v1242 = vunpack.c.l.b16 %v1112
        %v1243 = vunpack.c.l.b16 %v1113
        %v1244 = vunpack.c.h.b16 %v1113
        %v1245 = vunpack.c.l.b16 %v1114
        %v1246 = vunpack.c.l.b16 %v1115
        %v1247 = vunpack.c.h.b16 %v1115
        %v1248 = vunpack.c.l.b16 %v1116
        %v1249 = vunpack.c.l.b16 %v1117
        %v1250 = vunpack.c.h.b16 %v1117
        %v1251 = vunpack.c.l.b16 %v1118
        %v1252 = vunpack.c.l.b16 %v1119
        %v1253 = vunpack.c.h.b16 %v1119
        %v1254 = vunpack.c.l.b16 %v1120
        %v1255 = vunpack.c.l.b16 %v1121
        %v1256 = vunpack.c.h.b16 %v1121
        %v1257 = vunpack.c.l.b16 %v1122
        %v1258 = vunpack.c.l.b16 %v1123
        %v1259 = vunpack.c.h.b16 %v1123
        %v1260 = vunpack.c.l.b16 %v1124
        %v1261 = vunpack.c.l.b16 %v1125
        %v1262 = vunpack.c.h.b16 %v1125
        %v1263 = vunpack.c.l.b16 %v1126
        %v1264 = vunpack.c.l.b16 %v1127
        %v1265 = vunpack.c.h.b16 %v1127
        %v1266 = vunpack.c.l.b16 %v1128
        %v1267 = vunpack.c.l.b16 %v1129
        %v1268 = vunpack.c.h.b16 %v1129
        %v1269 = vunpack.c.l.b16 %v1130
        %v1270 = vunpack.c.l.b16 %v1131
        %v1271 = vunpack.c.h.b16 %v1131
        %v1272 = vunpack.c.l.b16 %v1132
        %v1273 = vunpack.c.l.b16 %v1133
        %v1274 = vunpack.c.h.b16 %v1133
        %v1275 = vunpack.c.l.b16 %v1134
        %v1276 = vpack.c.b16 %v1198, %v1195
        %v1277 = vpack.c.b16 %v1199, %v1196
        %v1278 = vpack.c.b16 %v1200, %v1197
        %v1279 = vpack.c.b16 %v1204, %v1201
        %v1280 = vpack.c.b16 %v1205, %v1202
        %v1281 = vpack.c.b16 %v1206, %v1203
        %v1282 = vpack.c.b16 %v1210, %v1207
        %v1283 = vpack.c.b16 %v1211, %v1208
        %v1284 = vpack.c.b16 %v1212, %v1209
        %v1285 = vpack.c.b16 %v1216, %v1213
        %v1286 = vpack.c.b16 %v1217, %v1214
        %v1287 = vpack.c.b16 %v1218, %v1215
        %v1288 = vpack.c.b16 %v1222, %v1219
        %v1289 = vpack.c.b16 %v1223, %v1220
        %v1290 = vpack.c.b16 %v1224, %v1221
        %v1291 = vpack.c.b16 %v1228, %v1225
        %v1292 = vpack.c.b16 %v1229, %v1226
        %v1293 = vpack.c.b16 %v1230, %v1227
        %v1294 = vpack.c.b16 %v1234, %v1231
        %v1295 = vpack.c.b16 %v1235, %v1232
        %v1296 = vpack.c.b16 %v1236, %v1233
        %v1297 = vpack.c.b16 %v1240, %v1237
        %v1298 = vpack.c.b16 %v1241, %v1238
        %v1299 = vpack.c.b16 %v1242, %v1239
        %v1300 = vpack.c.b16 %v1246, %v1243
        %v1301 = vpack.c.b16 %v1247, %v1244
        %v1302 = vpack.c.b16 %v1248, %v1245
        %v1303 = vpack.c.b16 %v1252, %v1249
        %v1304 = vpack.c.b16 %v1253, %v1250
        %v1305 = vpack.c.b16 %v1254, %v1251
        %v1306 = vpack.c.b16 %v1258, %v1255
        %v1307 = vpack.c.b16 %v1259, %v1256
        %v1308 = vpack.c.b16 %v1260, %v1257
        %v1309 = vpack.c.b16 %v1264, %v1261
        %v1310 = vpack.c.b16 %v1265, %v1262
        %v1311 = vpack.c.b16 %v1266, %v1263
        %v1312 = vpack.c.b16 %v1270, %v1267
        %v1313 = vpack.c.b16 %v1271, %v1268
        %v1314 = vpack.c.b16 %v1272, %v1269
        %v1315 = vpack.c.b16 %v1273, %v1273
        %v1316 = vpack.c.b16 %v1274, %v1274
        %v1317 = vpack.c.b16 %v1275, %v1275
        %vm1357 = vcmask 719872
        %v1359 = vsel %vm1357, %v1139, 0
        %v1362 = vsel %vm608, %v1315, 0
        %v1365 = vsel %vm608, %v1316, 0
        %v1368 = vsel %vm608, %v1317, 0
        %1370 = vmatpush.bf16.msra.mxu0 %v1297
        %1371 = vmatpush.bf16.msra.mxu0 %v1294
        %1372 = vmatpush.bf16.msra.mxu0 %v1291
        %1373 = vmatpush.bf16.msra.mxu0 %v1288
        %1374 = vmatpush.bf16.msra.mxu0 %v1285
        %1375 = vmatpush.bf16.msra.mxu0 %v1282
        %1376 = vmatpush.bf16.msra.mxu0 %v1279
        %1377 = vmatpush.bf16.msra.mxu0 %v1276
        %1378 = vmatmul.bf16.gmra.mxu0 %v1138
        %v1379 = vpop.f32.mrf.mxu0
        %v1380 = vadd.f32 0.0, %v1379
        %v1381 = vpop.f32.mrf.mxu0
        %1382 = vdwg.mxu0
        %1383 = vmatpush.bf16.msra.mxu0 0
        %1384 = vmatpush.bf16.msra.mxu0 0
        %1385 = vmatpush.bf16.msra.mxu0 %v1362
        %1386 = vmatpush.bf16.msra.mxu0 %v1312
        %1387 = vmatpush.bf16.msra.mxu0 %v1309
        %1388 = vmatpush.bf16.msra.mxu0 %v1306
        %1389 = vmatpush.bf16.msra.mxu0 %v1303
        %1390 = vmatpush.bf16.msra.mxu0 %v1300
        %1391 = vmatmul.bf16.gmra.mxu0 %v1359
        %v1392 = vpop.f32.mrf.mxu0
        %v1393 = vadd.f32 %v1380, %v1392
        %v1394 = vpop.f32.mrf.mxu0
        %1395 = vdwg.mxu0
        %1396 = vmatpush.bf16.msra.mxu0 %v1298
        %1397 = vmatpush.bf16.msra.mxu0 %v1295
        %1398 = vmatpush.bf16.msra.mxu0 %v1292
        %1399 = vmatpush.bf16.msra.mxu0 %v1289
        %1400 = vmatpush.bf16.msra.mxu0 %v1286
        %1401 = vmatpush.bf16.msra.mxu0 %v1283
        %1402 = vmatpush.bf16.msra.mxu0 %v1280
        %1403 = vmatpush.bf16.msra.mxu0 %v1277
        %1404 = vmatmul.bf16.gmra.mxu0 %v1138
        %v1405 = vpop.f32.mrf.mxu0
        %v1406 = vadd.f32 0.0, %v1405
        %v1407 = vpop.f32.mrf.mxu0
        %1408 = vdwg.mxu0
        %1409 = vmatpush.bf16.msra.mxu0 0
        %1410 = vmatpush.bf16.msra.mxu0 0
        %1411 = vmatpush.bf16.msra.mxu0 %v1365
        %1412 = vmatpush.bf16.msra.mxu0 %v1313
        %1413 = vmatpush.bf16.msra.mxu0 %v1310
        %1414 = vmatpush.bf16.msra.mxu0 %v1307
        %1415 = vmatpush.bf16.msra.mxu0 %v1304
        %1416 = vmatpush.bf16.msra.mxu0 %v1301
        %1417 = vmatmul.bf16.gmra.mxu0 %v1359
        %v1418 = vpop.f32.mrf.mxu0
        %v1419 = vadd.f32 %v1406, %v1418
        %v1420 = vpop.f32.mrf.mxu0
        %1421 = vdwg.mxu0
        %1422 = vmatpush.bf16.msra.mxu0 %v1299
        %1423 = vmatpush.bf16.msra.mxu0 %v1296
        %1424 = vmatpush.bf16.msra.mxu0 %v1293
        %1425 = vmatpush.bf16.msra.mxu0 %v1290
        %1426 = vmatpush.bf16.msra.mxu0 %v1287
        %1427 = vmatpush.bf16.msra.mxu0 %v1284
        %1428 = vmatpush.bf16.msra.mxu0 %v1281
        %1429 = vmatpush.bf16.msra.mxu0 %v1278
        %1430 = vmatmul.bf16.gmra.mxu0 %v1138
        %v1431 = vpop.f32.mrf.mxu0
        %v1432 = vadd.f32 0.0, %v1431
        %v1433 = vpop.f32.mrf.mxu0
        %1434 = vdwg.mxu0
        %1435 = vmatpush.bf16.msra.mxu0 0
        %1436 = vmatpush.bf16.msra.mxu0 0
        %1437 = vmatpush.bf16.msra.mxu0 %v1368
        %1438 = vmatpush.bf16.msra.mxu0 %v1314
        %1439 = vmatpush.bf16.msra.mxu0 %v1311
        %1440 = vmatpush.bf16.msra.mxu0 %v1308
        %1441 = vmatpush.bf16.msra.mxu0 %v1305
        %1442 = vmatpush.bf16.msra.mxu0 %v1302
        %1443 = vmatmul.bf16.gmra.mxu0 %v1359
        %v1444 = vpop.f32.mrf.mxu0
        %v1445 = vadd.f32 %v1432, %v1444
        %v1446 = vpop.f32.mrf.mxu0
        %1447 = vdwg.mxu0
        %v1448 = vld [vmem:[%s5] sm:$0xff]
        %1450 = vset.pattern.permute.xlu0 0
        %1451 = vperm.xlu0 %1450, %v1448
        %v1452 = vpop.permute.xlu0 %1451
        %v1454 = vmul.f32 %v1393, %v1452
        %v1455 = vmul.f32 %v1419, %v1452
        %v1456 = vmul.f32 %v1445, %v1452
        %v1457 = vld [vmem:[%s6] sm:$0xff]
        %1459 = vset.pattern.permute.xlu0 0
        %1460 = vperm.xlu0 %1459, %v1457
        %v1461 = vpop.permute.xlu0 %1460
        %v1463 = vadd.f32 %v1454, %v1461
        %v1464 = vadd.f32 %v1455, %v1461
        %v1465 = vadd.f32 %v1456, %v1461
        %v1466 = vmax.f32 %v1463, 0.0
        %v1467 = vmax.f32 %v1464, 0.0
        %v1468 = vmax.f32 %v1465, 0.0
        %1469 = vst [vmem:[%s325] sm:$0xff] %v1466
        %1470 = vst [vmem:[%s325 + $0x8] sm:$0xff] %v1467
        %vm1471 = vcmask 998400
        %1472 = vst.msk [vmem:[%s325 + $0x10] sm:$0xff] %vm1471, %v1468
        %s1473 = sand.u32 %s206, 1
        %s1474 = scalar_lea.sflag [#allocation7], %s1473
        %s1475 = sand.u32 %s206, 1
        %s1476 = smul.addr %s1475, 24
        %s1477 = scalar_lea.vmem [#allocation8], %s1476
        // Predicated region
        $region57: #{tpu_custom_call.1} parent=51 // pred_check
          %p1478 = pneg %p216
        $region58: #{tpu_custom_call.1} parent=51 // pred_check_branch
          %1480 = sbr.rel (%p1478) target = $region60
        $region59: #{tpu_custom_call.1} parent=51 // pred_region
          %1482 = vsyncadd %s1474, 0
          %s1483 = smul.addr %s25, 3
          %s1484 = smul.addr %s1483, 8
          %s1485 = scalar_lea.hbm %s8, %s1484
          %s1487 = sshll.u32 %s1477, 4
          %s1488 = int_to_ptr.vmem [resolvable:$true] %s1487
          %s1489 = sshll.u32 %s1485, 4
          %s1490 = int_to_ptr.hbm [resolvable:$true] %s1489
          %1492 = dma.vmem_to_hbm [thread:$0]  %s1488, 384, %s1490, %s1474
        $region60: #{tpu_custom_call.1} parent=51 // pred_fallthru
          _
      $region52: #{tpu_custom_call.1} parent=5 // pred_fallthru
        _
      %p1493 = scmp.le.s32.totalorder 2, %s20
      // Predicated region
      $region61: #{tpu_custom_call.1} parent=5 // pred_check
        %p1494 = pneg %p1493
      $region62: #{tpu_custom_call.1} parent=5 // pred_check_branch
        %1496 = sbr.rel (%p1494) target = $region64
      $region63: #{tpu_custom_call.1} parent=5 // pred_region
        %s1497 = ssub.s32 %s20, 2
        // Predicated region
        $region65: #{tpu_custom_call.1} parent=63 // pred_check
          %p1498 = pneg %p222
        $region66: #{tpu_custom_call.1} parent=63 // pred_check_branch
          %1500 = sbr.rel (%p1498) target = $region68
        $region67: #{tpu_custom_call.1} parent=63 // pred_region
          %s1501 = sand.u32 %s207, 1
          %s1502 = scalar_lea.sflag [#allocation7], %s1501
          %s1503 = sand.u32 %s207, 1
          %s1504 = smul.addr %s1503, 24
          %s1505 = scalar_lea.vmem [#allocation8], %s1504
          %1507 = dma.done %s1502, 384
        $region68: #{tpu_custom_call.1} parent=63 // pred_fallthru
          _
      $region64: #{tpu_custom_call.1} parent=5 // pred_fallthru
        _
    $region6: #{tpu_custom_call.1} parent=1 // loop_footer
      %s24 = sadd.s32 1, %s20
    $region7: #{tpu_custom_call.1} parent=1 // loop_footer_branch
      %19 = sbr.rel target = $region3
    $region8: #{tpu_custom_call.1} parent=1 // loop_exit
      _
    %1508 = vsyncpa [#allocation6], 1
    %s1509 = scalar_lea.sflag [#allocation6], 1
    %1510 = vsyncpa %s1509, 1
    %1511 = vsyncpa [#allocation7], 1
    %s1512 = scalar_lea.sflag [#allocation7], 1
    %1513 = vsyncpa %s1512, 1

</llo_original>
